<compile_context>
chip_gen: v6e
topology: v6e:2x2x1
jax: 0.10.0
libtpu: 0.0.40
codegen_flags: <defaults>
</compile_context>

<pallas_src>
import math
import numpy as np

import jax
import jax.numpy as jnp
from jax.experimental import pallas as pl
from jax.experimental.pallas import tpu as pltpu

BF16 = jnp.bfloat16
PRELU_INIT = jnp.float32(0.25)   # nn.PReLU() default init


# ----------------------------------------------------------------------------
# Pallas multi-tap matmul kernel (conv engine)
# ----------------------------------------------------------------------------
def _make_tap_kernel(n_taps, mv, static_shifts, has_prelu, has_bias, has_res):
    """Kernel operand order: [shifts?] [alpha?] x w [bias?] [residual?] out."""

    def kernel(*refs):
        i = 0
        shift_ref = None
        if static_shifts is None:
            shift_ref = refs[i]; i += 1
        alpha_ref = None
        if has_prelu:
            alpha_ref = refs[i]; i += 1
        x_ref = refs[i]; i += 1
        w_ref = refs[i]; i += 1
        bias_ref = None
        if has_bias:
            bias_ref = refs[i]; i += 1
        res_ref = None
        if has_res:
            res_ref = refs[i]; i += 1
        out_ref = refs[i]

        ph = pl.program_id(0)
        acc = None
        for t in range(n_taps):
            if static_shifts is None:
                start = shift_ref[ph, t]
            else:
                start = static_shifts[t]
            a = x_ref[pl.ds(start, mv), :]
            d = jnp.dot(a, w_ref[t], preferred_element_type=jnp.float32)
            acc = d if acc is None else acc + d
        if has_bias:
            acc = acc + bias_ref[...].astype(jnp.float32)
        if has_prelu:
            alpha = alpha_ref[0]
            acc = jnp.where(acc >= 0.0, acc, alpha * acc)
        if has_res:
            acc = acc + res_ref[...].astype(jnp.float32)
        out_ref[...] = acc.astype(out_ref.dtype)

    return kernel


def _pick_tn(cout, k_eff, n_taps):
    """Output-channel tile: full Cout when small / not lane-tileable, else up to
    512 lanes while keeping the double-buffered weight block modest."""
    if cout % 128 != 0 or cout <= 256:
        return cout
    tn = min(cout, 512)
    while tn > 128 and n_taps * k_eff * tn * 2 > 6 * (1 << 20):
        tn //= 2
    return tn


def tap_matmul(x2d, w, mv, *, shifts=None, static_shifts=None,
               prelu_alpha=None, bias=None, residual=None):
    """x2d: (Mg, C) bf16 rows (may include guard rows).
       w  : (P, n_taps, C, Cout) bf16.
       Returns (P, mv, Cout) bf16."""
    x2d = x2d.astype(BF16)
    P, n_taps, C, cout = w.shape
    Mg, C2 = x2d.shape
    assert C == C2
    TN = _pick_tn(cout, C, n_taps)
    J = cout // TN

    in_specs = []
    args = []
    if static_shifts is None:
        in_specs.append(pl.BlockSpec(memory_space=pltpu.MemorySpace.SMEM))
        args.append(shifts)
    if prelu_alpha is not None:
        in_specs.append(pl.BlockSpec(memory_space=pltpu.MemorySpace.SMEM))
        args.append(jnp.reshape(jnp.asarray(prelu_alpha, jnp.float32), (1,)))
    in_specs += [
        pl.BlockSpec((Mg, C), lambda p, j: (0, 0)),
        pl.BlockSpec((None, n_taps, C, TN), lambda p, j: (p, 0, 0, j)),
    ]
    args += [x2d, w]
    if bias is not None:
        in_specs.append(pl.BlockSpec((1, TN), lambda p, j: (0, j)))
        args.append(bias)
    if residual is not None:
        in_specs.append(pl.BlockSpec((mv, TN), lambda p, j: (0, j)))
        args.append(residual.astype(BF16))
    out_spec = pl.BlockSpec((None, mv, TN), lambda p, j: (p, 0, j))

    kern = _make_tap_kernel(n_taps, mv, static_shifts,
                            prelu_alpha is not None, bias is not None,
                            residual is not None)
    flops = 2 * P * mv * n_taps * C * cout
    bytes_acc = (x2d.size * 2 + w.size * 2 + P * mv * cout * 2
                 + (residual.size * 2 if residual is not None else 0)
                 + (bias.size * 4 if bias is not None else 0))

    return pl.pallas_call(
        kern,
        out_shape=jax.ShapeDtypeStruct((P, mv, cout), BF16),
        grid_spec=pltpu.PrefetchScalarGridSpec(
            num_scalar_prefetch=0, grid=(P, J),
            in_specs=in_specs, out_specs=out_spec),
        compiler_params=pltpu.CompilerParams(
            dimension_semantics=("parallel", "parallel"),
            vmem_limit_bytes=32 * 1024 * 1024),
        cost_estimate=pl.CostEstimate(flops=flops, transcendentals=0,
                                      bytes_accessed=bytes_acc),
    )(*args)


# ----------------------------------------------------------------------------
# Conv / ConvTranspose / PixelShuffle built on the Pallas kernel (NHWC)
# ----------------------------------------------------------------------------
def _pad_flat_guard(x, pad):
    """Zero-pad NHWC spatially, flatten to rows, add guard rows so every
    row-shifted tap view stays in-bounds."""
    N, H, W, C = x.shape
    Hp, Wp = H + 2 * pad, W + 2 * pad
    G = pad * Wp + pad
    xp = jnp.pad(x, ((0, 0), (pad, pad), (pad, pad), (0, 0)))
    xg = jnp.pad(xp.reshape(N * Hp * Wp, C), ((G, G), (0, 0)))
    return xg, N * Hp * Wp, Hp, Wp, G


def conv2d(p, x, *, stride=1, prelu_alpha=None, residual=None):
    """PyTorch-semantics Conv2d on bf16 NHWC.  p['w']: (P, n_taps, Cin*, Cout)."""
    N, H, W, C = x.shape
    w = p['w']
    _, n_taps, K, cout = w.shape

    if n_taps == 9:                      # 3x3 stride-1 pad-1, in-kernel taps
        assert stride == 1
        xg, mv, Hp, Wp, G = _pad_flat_guard(x, 1)
        shifts = tuple(G + (ti - 1) * Wp + (tj - 1)
                       for ti in range(3) for tj in range(3))
        y = tap_matmul(xg, w, mv, static_shifts=shifts,
                       prelu_alpha=prelu_alpha, bias=p.get('b'))
        y = y.reshape(N, Hp, Wp, cout)[:, 1:H + 1, 1:W + 1, :]
        if residual is not None:
            y = y + residual
        return y

    # 'mat' layout: 1x1 convs and strided / tiny-Cin convs via im2col matmul.
    k = int(round(math.sqrt(K // C)))
    pad = (k - 1) // 2
    if k == 1:
        Ho, Wo = H, W
        cols = x.reshape(N * H * W, C)
    else:
        Ho = (H + 2 * pad - k) // stride + 1
        Wo = (W + 2 * pad - k) // stride + 1
        xp = jnp.pad(x, ((0, 0), (pad, pad), (pad, pad), (0, 0)))
        taps = [xp[:, i:i + stride * Ho:stride, j:j + stride * Wo:stride, :]
                for i in range(k) for j in range(k)]
        cols = jnp.concatenate(taps, axis=-1).reshape(N * Ho * Wo, k * k * C)
    mv = N * Ho * Wo
    res2d = None if residual is None else residual.reshape(mv, cout)
    y = tap_matmul(cols, w, mv, static_shifts=(0,),
                   prelu_alpha=prelu_alpha, bias=p.get('b'), residual=res2d)
    return y.reshape(N, Ho, Wo, cout)


def conv_transpose2d(p, x, prelu_alpha=None):
    """PyTorch ConvTranspose2d(k=4, s=2, p=1, bias=False) via sub-pixel
    decomposition; all 4 phase convolutions run in ONE pallas_call (grid axis P)."""
    N, H, W, C = x.shape
    cout = p['w'].shape[-1]
    xg, mv, Hp, Wp, G = _pad_flat_guard(x, 1)
    sh = np.zeros((4, 4), np.int32)
    for a in range(2):
        for b in range(2):
            for ti in range(2):
                for tj in range(2):
                    sh[a * 2 + b, ti * 2 + tj] = G + (a + ti - 1) * Wp + (b + tj - 1)
    y = tap_matmul(xg, p['w'], mv, shifts=jnp.asarray(sh),
                   prelu_alpha=prelu_alpha)
    y = y.reshape(4, N, Hp, Wp, cout)[:, :, 1:H + 1, 1:W + 1, :]
    y = y.reshape(2, 2, N, H, W, cout).transpose(2, 3, 0, 4, 1, 5)
    return y.reshape(N, 2 * H, 2 * W, cout)


def pixel_shuffle_nhwc(x, r):
    N, H, W, C = x.shape
    x = x.reshape(N, H, W, C // (r * r), r, r)
    x = x.transpose(0, 1, 4, 2, 5, 3)
    return x.reshape(N, H * r, W * r, C // (r * r))


# ----------------------------------------------------------------------------
# Deterministic synthetic parameters (pre-transposed, bf16 kernel layout)
# ----------------------------------------------------------------------------
_KEY = jax.random.PRNGKey(0)
_CNT = [0]


def _next_key():
    _CNT[0] += 1
    return jax.random.fold_in(_KEY, _CNT[0])


def vec_w(n):
    return jax.random.normal(_next_key(), (n,), jnp.float32) * 0.01


def lin_w(cout, cin):
    return jax.random.normal(_next_key(), (cout, cin),
                             jnp.float32) * (1.0 / math.sqrt(cin))


def conv_param(w_pt, *, stride=1, bias=None):
    """w_pt: PyTorch Conv2d layout (Cout, Cin, kh, kw) -> kernel layout."""
    cout, cin, k, _ = w_pt.shape
    if k == 3 and stride == 1 and cin >= 32:
        w = jnp.transpose(w_pt, (2, 3, 1, 0)).reshape(1, 9, cin, cout)
    else:
        w = jnp.transpose(w_pt, (2, 3, 1, 0)).reshape(1, 1, k * k * cin, cout)
    p = dict(w=w.astype(BF16))
    if bias is not None:
        p['b'] = jnp.reshape(bias, (1, cout)).astype(jnp.float32)
    return p


def make_conv(cout, cin, k, stride=1, bias=False):
    fan_in = cin * k * k
    w = jax.random.normal(_next_key(), (cout, cin, k, k),
                          jnp.float32) * (0.5 / math.sqrt(fan_in))
    return conv_param(w, stride=stride, bias=vec_w(cout) if bias else None)


def convT_param(w_pt):
    """w_pt: PyTorch ConvTranspose2d layout (Cin, Cout, 4, 4) ->
       (4 phases, 4 taps, Cin, Cout) bf16, direct-conv (cross-correlation) order."""
    blocks = []
    for a in range(2):
        for b in range(2):
            taps = [w_pt[:, :, 3 - a - 2 * ti, 3 - b - 2 * tj]
                    for ti in range(2) for tj in range(2)]
            blocks.append(jnp.stack(taps, axis=0))
    w = jnp.stack(blocks, axis=0)
    return dict(w=w.astype(BF16))


def make_convT(cin, cout, k=4):
    fan_in = cin * k * k
    w = jax.random.normal(_next_key(), (cin, cout, k, k),
                          jnp.float32) * (0.5 / math.sqrt(fan_in))
    return convT_param(w)


# ----------------------------------------------------------------------------
# Modules (params + apply), matching the PyTorch forward passes
# ----------------------------------------------------------------------------
def channel_gate_p(gc, rr=16):
    return dict(w1=lin_w(gc // rr, gc), b1=vec_w(gc // rr),
                w2=lin_w(gc, gc // rr), b2=vec_w(gc))


def channel_gate(p, x):
    # TODO(synk): global avg/max pooling + tiny MLP + sigmoid gate stay plain
    # JAX (<= 2N rows; a Pallas launch would be pure overhead).
    n = x.shape[0]
    xf = x.astype(jnp.float32)
    avg = jnp.mean(xf, axis=(1, 2))
    mx = jnp.max(xf, axis=(1, 2))
    v = jnp.concatenate([avg, mx], axis=0)                      # (2N, C)
    h = jnp.maximum(jnp.dot(v, p['w1'].T) + p['b1'], 0.0)
    att = jnp.dot(h, p['w2'].T) + p['b2']
    att = att[:n] + att[n:]
    scale = jax.nn.sigmoid(att)[:, None, None, :].astype(x.dtype)
    return x * scale


def gdce_p(cin, cout=256):
    mid = (128 + cout) // 3
    return dict(c1=make_conv(64, cin, 3), a1=PRELU_INIT,
                c2=make_conv(mid, 64, 3, stride=2), a2=PRELU_INIT,
                c3=make_conv(cout, mid, 3),
                gate=channel_gate_p(cout))


def gdce_apply(p, x):
    h = conv2d(p['c1'], x, prelu_alpha=p['a1'])
    h = conv2d(p['c2'], h, stride=2, prelu_alpha=p['a2'])
    h = conv2d(p['c3'], h)
    return channel_gate(p['gate'], h)


def bridge_p(cin, cout):
    c1 = (cin * 2 + cout) // 3
    c2 = (cin + cout * 2) // 3
    return dict(c1=make_conv(c1, cin, 3), a1=PRELU_INIT,
                c2=make_conv(c2, c1, 3), a2=PRELU_INIT,
                c3=make_conv(cout, c2, 3), a3=PRELU_INIT)


def bridge_apply(p, x):
    h = conv2d(p['c1'], x, prelu_alpha=p['a1'])
    h = conv2d(p['c2'], h, prelu_alpha=p['a2'])
    return conv2d(p['c3'], h, prelu_alpha=p['a3'])


def rdb_p(nC, nDense, growth):
    dense = []
    c = nC
    for _ in range(nDense):
        dense.append(dict(c=make_conv(growth, c, 3), a=PRELU_INIT))
        c += growth
    return dict(dense=dense, c1x1=make_conv(nC, c, 1))


def rdb_apply(p, x):
    out = x
    for d in p['dense']:
        y = conv2d(d['c'], out, prelu_alpha=d['a'])
        out = jnp.concatenate([out, y], axis=-1)
    # residual add fused into the 1x1-conv epilogue
    return conv2d(p['c1x1'], out, residual=x)


def grdb_p(nC, nDense, growth, numdb):
    return dict(rdbs=[rdb_p(nC, nDense, growth) for _ in range(numdb)],
                c1x1=make_conv(nC, nC * numdb, 1, bias=True))


def grdb_apply(p, x):
    out = x
    outs = []
    for rp in p['rdbs']:
        out = rdb_apply(rp, out)
        outs.append(out)
    cat = jnp.concatenate(outs, axis=-1)
    # bias + residual add fused into the 1x1-conv epilogue
    return conv2d(p['c1x1'], cat, residual=x)


def gdu_p(nC, nDense, growth, ndb):
    return dict(
        grdb1=grdb_p(nC, nDense, growth, ndb),
        down1=make_conv(nC * 2, nC, 3, stride=2), a1=PRELU_INIT,
        grdb2=grdb_p(nC * 2, nDense, growth, ndb),
        down2=make_conv(nC * 4, nC * 2, 3, stride=2), a2=PRELU_INIT,
        grdb3=grdb_p(nC * 4, nDense, growth, ndb),
        up1=make_convT(nC * 4, nC * 2), a3=PRELU_INIT,
        grdb4=grdb_p(nC * 2, nDense, growth, ndb),
        up2=make_convT(nC * 2, nC), a4=PRELU_INIT,
        grdb5=grdb_p(nC, nDense, growth, ndb),
        bridge1=bridge_p(nC, nC),
        bridge2=bridge_p(nC * 2, nC * 2),
    )


def gdu_apply(p, x):
    x = grdb_apply(p['grdb1'], x)
    x1 = bridge_apply(p['bridge1'], x)
    x = conv2d(p['down1'], x, stride=2, prelu_alpha=p['a1'])
    x = grdb_apply(p['grdb2'], x)
    x2 = bridge_apply(p['bridge2'], x)
    x = conv2d(p['down2'], x, stride=2, prelu_alpha=p['a2'])
    x = grdb_apply(p['grdb3'], x)
    x = conv_transpose2d(p['up1'], x, prelu_alpha=p['a3'])
    x = grdb_apply(p['grdb4'], x + x2)
    x = conv_transpose2d(p['up2'], x, prelu_alpha=p['a4'])
    x = grdb_apply(p['grdb5'], x + x1)
    return x


def mega_dense_unet_p(base_channel=256, nDenselayers=4, growRate=64,
                      nDenseBlocks=4):
    bc = base_channel
    return dict(
        gdce1=gdce_p(1, bc), gdce2=gdce_p(1, bc),
        conv1=make_conv(bc, 3, 3), a1=PRELU_INIT,
        conv2=make_conv(bc, bc, 3, stride=2), a2=PRELU_INIT,
        gdce1_1=make_conv(bc, bc * 2, 3),
        gdce2_1=make_conv(bc, bc * 2, 3),
        gdu1=gdu_p(bc, nDenselayers, growRate, nDenseBlocks),
        gdu2=gdu_p(bc, nDenselayers, growRate, nDenseBlocks),
        gdu3=gdu_p(bc, nDenselayers, growRate, nDenseBlocks),
        gdu4=gdu_p(bc, nDenselayers, growRate, nDenseBlocks),
        recon=make_conv(bc, bc * 4, 3), a3=PRELU_INIT,
        gdu5=gdu_p(bc, nDenselayers, growRate, nDenseBlocks),
        final=make_conv(3, bc // 4, 3),
    )


# ----------------------------------------------------------------------------
# Jitted blocks.  The five GDUs / two GDCEs share pytree structure + shapes,
# so each block compiles exactly once and is reused.
# ----------------------------------------------------------------------------
@jax.jit
def _stem_apply(conv1, a1, conv2, a2, rgb):
    h = conv2d(conv1, rgb, prelu_alpha=a1)
    return conv2d(conv2, h, stride=2, prelu_alpha=a2)


@jax.jit
def _fuse_grid_apply(cp, h, grid):
    return conv2d(cp, jnp.concatenate([h, grid], axis=-1))


@jax.jit
def _recon_apply(cp, a, x1, x2, x3, x4):
    return conv2d(cp, jnp.concatenate([x1, x2, x3, x4], axis=-1), prelu_alpha=a)


@jax.jit
def _tail_apply(cp, h, residual_nhwc):
    h = pixel_shuffle_nhwc(h, 2)
    out = conv2d(cp, h).astype(jnp.float32) + residual_nhwc
    return jnp.transpose(out, (0, 3, 1, 2))


_gdce_jit = jax.jit(gdce_apply)
_gdu_jit = jax.jit(gdu_apply)


def mega_dense_unet_apply(p, x_nchw):
    x = jnp.transpose(x_nchw, (0, 2, 3, 1)).astype(jnp.float32)   # -> NHWC
    residual = x[..., :3]
    xb = x.astype(BF16)
    grid8 = _gdce_jit(p['gdce1'], xb[..., 3:4])
    grid16 = _gdce_jit(p['gdce2'], xb[..., 4:5])
    h = _stem_apply(p['conv1'], p['a1'], p['conv2'], p['a2'], xb[..., :3])
    x1 = _gdu_jit(p['gdu1'], h)
    x2 = _gdu_jit(p['gdu2'], h)
    x3 = _gdu_jit(p['gdu3'], _fuse_grid_apply(p['gdce1_1'], h, grid8))
    x4 = _gdu_jit(p['gdu4'], _fuse_grid_apply(p['gdce2_1'], h, grid16))
    h = _recon_apply(p['recon'], p['a3'], x1, x2, x3, x4)
    h = _gdu_jit(p['gdu5'], h)
    return _tail_apply(p['final'], h, residual)


# ----------------------------------------------------------------------------
if __name__ == "__main__":
    key = jax.random.PRNGKey(0)
    k1, k2, k3, k4, k5, k6, k7, k8 = jax.random.split(key, 8)

    # (1) 3x3 stride-1 conv (in-kernel tap path) with fused PReLU vs XLA ref.
    x = jax.random.normal(k1, (1, 6, 10, 64), jnp.float32)
    w = jax.random.normal(k2, (128, 64, 3, 3), jnp.float32) * 0.05
    pp = conv_param(w, stride=1)
    y = conv2d(pp, x.astype(BF16), prelu_alpha=jnp.float32(0.25))
    x32 = x.astype(BF16).astype(jnp.float32)
    w32 = w.astype(BF16).astype(jnp.float32)
    ref = jax.lax.conv_general_dilated(
        x32, jnp.transpose(w32, (2, 3, 1, 0)), (1, 1), ((1, 1), (1, 1)),
        dimension_numbers=('NHWC', 'HWIO', 'NHWC'))
    ref = jnp.where(ref >= 0, ref, 0.25 * ref)
    np.testing.assert_allclose(np.asarray(y.astype(jnp.float32)),
                               np.asarray(ref), rtol=5e-2, atol=5e-2)

    # (2) ConvTranspose2d(k=4, s=2, p=1) via batched phase kernel vs XLA ref.
    x = jax.random.normal(k3, (1, 5, 6, 32), jnp.float32)
    w = jax.random.normal(k4, (32, 64, 4, 4), jnp.float32) * 0.05
    pp = convT_param(w)
    y = conv_transpose2d(pp, x.astype(BF16))
    x32 = x.astype(BF16).astype(jnp.float32)
    w32 = w.astype(BF16).astype(jnp.float32)
    rhs = jnp.transpose(w32[:, :, ::-1, ::-1], (2, 3, 0, 1))
    ref = jax.lax.conv_general_dilated(
        x32, rhs, (1, 1), ((2, 2), (2, 2)), lhs_dilation=(2, 2),
        dimension_numbers=('NHWC', 'HWIO', 'NHWC'))
    np.testing.assert_allclose(np.asarray(y.astype(jnp.float32)),
                               np.asarray(ref), rtol=5e-2, atol=5e-2)

    # (3) 1x1 conv with fused bias + residual epilogue vs reference.
    x = jax.random.normal(k5, (1, 4, 4, 64), jnp.float32)
    w = jax.random.normal(k6, (64, 64, 1, 1), jnp.float32) * 0.05
    b = jax.random.normal(k7, (64,), jnp.float32) * 0.1
    r = jax.random.normal(k8, (1, 4, 4, 64), jnp.float32)
    pp = conv_param(w, stride=1, bias=b)
    y = conv2d(pp, x.astype(BF16), residual=r.astype(BF16))
    x32 = x.astype(BF16).astype(jnp.float32)
    w32 = w.astype(BF16).astype(jnp.float32)
    r32 = r.astype(BF16).astype(jnp.float32)
    ref = jnp.einsum('nhwc,oc->nhwo', x32, w32[:, :, 0, 0]) + b + r32
    np.testing.assert_allclose(np.asarray(y.astype(jnp.float32)),
                               np.asarray(ref), rtol=5e-2, atol=5e-2)

    # --- full MegaDenseUnet forward ------------------------------------------
    params = mega_dense_unet_p()
    # Input: (N, 5, H, W) = 3 RGB channels + 2 "grid" channels (NCHW).
    xin = jax.random.normal(jax.random.PRNGKey(0), (1, 5, 16, 16), jnp.float32)
    out = jax.block_until_ready(mega_dense_unet_apply(params, xin))
    assert out.shape == (1, 3, 16, 16), out.shape
    assert bool(jnp.all(jnp.isfinite(out))), "non-finite output"
    print("KERNEL_OK")
</pallas_src>

<mosaic_0001>
module attributes {stable_mosaic.version = 11 : i64} {
  func.func @kernel(%arg0: i32, %arg1: i32, %arg2: memref<1xf32, #tpu.memory_space<smem>>, %arg3: memref<122x64xbf16, #tpu.memory_space<vmem>>, %arg4: memref<1x9x64x128xbf16, #tpu.memory_space<vmem>>, %arg5: memref<1x96x128xbf16, #tpu.memory_space<vmem>>) attributes {dimension_semantics = [#tpu.dimension_semantics<parallel>, #tpu.dimension_semantics<parallel>], iteration_bounds = array<i64: 1, 1>, scalar_prefetch = 0 : i64, scratch_operands = 0 : i64, tpu.core_type = #tpu.core_type<tc>, window_params = [{transform_indices = @transform_0, window_bounds = array<i64: 1>}, {pipeline_mode = #tpu.pipeline_mode<synchronous>, transform_indices = @transform_1, window_bounds = array<i64: 122, 64>}, {transform_indices = @transform_2, window_bounds = array<i64: 1, 9, 64, 128>}, {transform_indices = @transform_3, window_bounds = array<i64: 1, 96, 128>}]} {
    %c0 = arith.constant 0 : index
    %c0_0 = arith.constant 0 : index
    %0 = vector.load %arg3[%c0, %c0_0] : memref<122x64xbf16, #tpu.memory_space<vmem>>, vector<96x64xbf16>
    %c0_1 = arith.constant 0 : index
    %c0_2 = arith.constant 0 : index
    %c0_3 = arith.constant 0 : index
    %c0_4 = arith.constant 0 : index
    %1 = vector.load %arg4[%c0_1, %c0_2, %c0_3, %c0_4] : memref<1x9x64x128xbf16, #tpu.memory_space<vmem>>, vector<1x1x64x128xbf16>
    %2 = vector.shape_cast %1 : vector<1x1x64x128xbf16> to vector<64x128xbf16>
    %cst = arith.constant dense<0.000000e+00> : vector<96x128xf32>
    %3 = tpu.matmul %0, %2, %cst {dimension_numbers = #tpu.dot_dimension_numbers<[1], [0], [0], [1], [0, 0, 1, 1], [], []>} : vector<96x64xbf16>, vector<64x128xbf16>, vector<96x128xf32> -> vector<96x128xf32>
    %c1 = arith.constant 1 : index
    %c0_5 = arith.constant 0 : index
    %4 = vector.load %arg3[%c1, %c0_5] : memref<122x64xbf16, #tpu.memory_space<vmem>>, vector<96x64xbf16>
    %c0_6 = arith.constant 0 : index
    %c1_7 = arith.constant 1 : index
    %c0_8 = arith.constant 0 : index
    %c0_9 = arith.constant 0 : index
    %5 = vector.load %arg4[%c0_6, %c1_7, %c0_8, %c0_9] : memref<1x9x64x128xbf16, #tpu.memory_space<vmem>>, vector<1x1x64x128xbf16>
    %6 = vector.shape_cast %5 : vector<1x1x64x128xbf16> to vector<64x128xbf16>
    %cst_10 = arith.constant dense<0.000000e+00> : vector<96x128xf32>
    %7 = tpu.matmul %4, %6, %cst_10 {dimension_numbers = #tpu.dot_dimension_numbers<[1], [0], [0], [1], [0, 0, 1, 1], [], []>} : vector<96x64xbf16>, vector<64x128xbf16>, vector<96x128xf32> -> vector<96x128xf32>
    %8 = arith.addf %3, %7 : vector<96x128xf32>
    %c2 = arith.constant 2 : index
    %c0_11 = arith.constant 0 : index
    %9 = vector.load %arg3[%c2, %c0_11] : memref<122x64xbf16, #tpu.memory_space<vmem>>, vector<96x64xbf16>
    %c0_12 = arith.constant 0 : index
    %c2_13 = arith.constant 2 : index
    %c0_14 = arith.constant 0 : index
    %c0_15 = arith.constant 0 : index
    %10 = vector.load %arg4[%c0_12, %c2_13, %c0_14, %c0_15] : memref<1x9x64x128xbf16, #tpu.memory_space<vmem>>, vector<1x1x64x128xbf16>
    %11 = vector.shape_cast %10 : vector<1x1x64x128xbf16> to vector<64x128xbf16>
    %cst_16 = arith.constant dense<0.000000e+00> : vector<96x128xf32>
    %12 = tpu.matmul %9, %11, %cst_16 {dimension_numbers = #tpu.dot_dimension_numbers<[1], [0], [0], [1], [0, 0, 1, 1], [], []>} : vector<96x64xbf16>, vector<64x128xbf16>, vector<96x128xf32> -> vector<96x128xf32>
    %13 = arith.addf %8, %12 : vector<96x128xf32>
    %c12 = arith.constant 12 : index
    %c0_17 = arith.constant 0 : index
    %14 = vector.load %arg3[%c12, %c0_17] : memref<122x64xbf16, #tpu.memory_space<vmem>>, vector<96x64xbf16>
    %c0_18 = arith.constant 0 : index
    %c3 = arith.constant 3 : index
    %c0_19 = arith.constant 0 : index
    %c0_20 = arith.constant 0 : index
    %15 = vector.load %arg4[%c0_18, %c3, %c0_19, %c0_20] : memref<1x9x64x128xbf16, #tpu.memory_space<vmem>>, vector<1x1x64x128xbf16>
    %16 = vector.shape_cast %15 : vector<1x1x64x128xbf16> to vector<64x128xbf16>
    %cst_21 = arith.constant dense<0.000000e+00> : vector<96x128xf32>
    %17 = tpu.matmul %14, %16, %cst_21 {dimension_numbers = #tpu.dot_dimension_numbers<[1], [0], [0], [1], [0, 0, 1, 1], [], []>} : vector<96x64xbf16>, vector<64x128xbf16>, vector<96x128xf32> -> vector<96x128xf32>
    %18 = arith.addf %13, %17 : vector<96x128xf32>
    %c13 = arith.constant 13 : index
    %c0_22 = arith.constant 0 : index
    %19 = vector.load %arg3[%c13, %c0_22] : memref<122x64xbf16, #tpu.memory_space<vmem>>, vector<96x64xbf16>
    %c0_23 = arith.constant 0 : index
    %c4 = arith.constant 4 : index
    %c0_24 = arith.constant 0 : index
    %c0_25 = arith.constant 0 : index
    %20 = vector.load %arg4[%c0_23, %c4, %c0_24, %c0_25] : memref<1x9x64x128xbf16, #tpu.memory_space<vmem>>, vector<1x1x64x128xbf16>
    %21 = vector.shape_cast %20 : vector<1x1x64x128xbf16> to vector<64x128xbf16>
    %cst_26 = arith.constant dense<0.000000e+00> : vector<96x128xf32>
    %22 = tpu.matmul %19, %21, %cst_26 {dimension_numbers = #tpu.dot_dimension_numbers<[1], [0], [0], [1], [0, 0, 1, 1], [], []>} : vector<96x64xbf16>, vector<64x128xbf16>, vector<96x128xf32> -> vector<96x128xf32>
    %23 = arith.addf %18, %22 : vector<96x128xf32>
    %c14 = arith.constant 14 : index
    %c0_27 = arith.constant 0 : index
    %24 = vector.load %arg3[%c14, %c0_27] : memref<122x64xbf16, #tpu.memory_space<vmem>>, vector<96x64xbf16>
    %c0_28 = arith.constant 0 : index
    %c5 = arith.constant 5 : index
    %c0_29 = arith.constant 0 : index
    %c0_30 = arith.constant 0 : index
    %25 = vector.load %arg4[%c0_28, %c5, %c0_29, %c0_30] : memref<1x9x64x128xbf16, #tpu.memory_space<vmem>>, vector<1x1x64x128xbf16>
    %26 = vector.shape_cast %25 : vector<1x1x64x128xbf16> to vector<64x128xbf16>
    %cst_31 = arith.constant dense<0.000000e+00> : vector<96x128xf32>
    %27 = tpu.matmul %24, %26, %cst_31 {dimension_numbers = #tpu.dot_dimension_numbers<[1], [0], [0], [1], [0, 0, 1, 1], [], []>} : vector<96x64xbf16>, vector<64x128xbf16>, vector<96x128xf32> -> vector<96x128xf32>
    %28 = arith.addf %23, %27 : vector<96x128xf32>
    %c24 = arith.constant 24 : index
    %c0_32 = arith.constant 0 : index
    %29 = vector.load %arg3[%c24, %c0_32] : memref<122x64xbf16, #tpu.memory_space<vmem>>, vector<96x64xbf16>
    %c0_33 = arith.constant 0 : index
    %c6 = arith.constant 6 : index
    %c0_34 = arith.constant 0 : index
    %c0_35 = arith.constant 0 : index
    %30 = vector.load %arg4[%c0_33, %c6, %c0_34, %c0_35] : memref<1x9x64x128xbf16, #tpu.memory_space<vmem>>, vector<1x1x64x128xbf16>
    %31 = vector.shape_cast %30 : vector<1x1x64x128xbf16> to vector<64x128xbf16>
    %cst_36 = arith.constant dense<0.000000e+00> : vector<96x128xf32>
    %32 = tpu.matmul %29, %31, %cst_36 {dimension_numbers = #tpu.dot_dimension_numbers<[1], [0], [0], [1], [0, 0, 1, 1], [], []>} : vector<96x64xbf16>, vector<64x128xbf16>, vector<96x128xf32> -> vector<96x128xf32>
    %33 = arith.addf %28, %32 : vector<96x128xf32>
    %c25 = arith.constant 25 : index
    %c0_37 = arith.constant 0 : index
    %34 = vector.load %arg3[%c25, %c0_37] : memref<122x64xbf16, #tpu.memory_space<vmem>>, vector<96x64xbf16>
    %c0_38 = arith.constant 0 : index
    %c7 = arith.constant 7 : index
    %c0_39 = arith.constant 0 : index
    %c0_40 = arith.constant 0 : index
    %35 = vector.load %arg4[%c0_38, %c7, %c0_39, %c0_40] : memref<1x9x64x128xbf16, #tpu.memory_space<vmem>>, vector<1x1x64x128xbf16>
    %36 = vector.shape_cast %35 : vector<1x1x64x128xbf16> to vector<64x128xbf16>
    %cst_41 = arith.constant dense<0.000000e+00> : vector<96x128xf32>
    %37 = tpu.matmul %34, %36, %cst_41 {dimension_numbers = #tpu.dot_dimension_numbers<[1], [0], [0], [1], [0, 0, 1, 1], [], []>} : vector<96x64xbf16>, vector<64x128xbf16>, vector<96x128xf32> -> vector<96x128xf32>
    %38 = arith.addf %33, %37 : vector<96x128xf32>
    %c26 = arith.constant 26 : index
    %c0_42 = arith.constant 0 : index
    %39 = vector.load %arg3[%c26, %c0_42] : memref<122x64xbf16, #tpu.memory_space<vmem>>, vector<96x64xbf16>
    %c0_43 = arith.constant 0 : index
    %c8 = arith.constant 8 : index
    %c0_44 = arith.constant 0 : index
    %c0_45 = arith.constant 0 : index
    %40 = vector.load %arg4[%c0_43, %c8, %c0_44, %c0_45] : memref<1x9x64x128xbf16, #tpu.memory_space<vmem>>, vector<1x1x64x128xbf16>
    %41 = vector.shape_cast %40 : vector<1x1x64x128xbf16> to vector<64x128xbf16>
    %cst_46 = arith.constant dense<0.000000e+00> : vector<96x128xf32>
    %42 = tpu.matmul %39, %41, %cst_46 {dimension_numbers = #tpu.dot_dimension_numbers<[1], [0], [0], [1], [0, 0, 1, 1], [], []>} : vector<96x64xbf16>, vector<64x128xbf16>, vector<96x128xf32> -> vector<96x128xf32>
    %43 = arith.addf %38, %42 : vector<96x128xf32>
    %c0_47 = arith.constant 0 : index
    %44 = memref.load %arg2[%c0_47] : memref<1xf32, #tpu.memory_space<smem>>
    %cst_48 = arith.constant 0.000000e+00 : f32
    %45 = vector.broadcast %cst_48 : f32 to vector<96x128xf32>
    %46 = arith.cmpf oge, %43, %45 : vector<96x128xf32>
    %47 = vector.broadcast %44 : f32 to vector<96x128xf32>
    %48 = arith.mulf %47, %43 : vector<96x128xf32>
    %49 = arith.select %46, %43, %48 : vector<96x128xi1>, vector<96x128xf32>
    %50 = arith.truncf %49 : vector<96x128xf32> to vector<96x128xbf16>
    %c0_49 = arith.constant 0 : index
    %c0_50 = arith.constant 0 : index
    %c0_51 = arith.constant 0 : index
    %51 = vector.load %arg5[%c0_49, %c0_50, %c0_51] : memref<1x96x128xbf16, #tpu.memory_space<vmem>>, vector<1x96x128xbf16>
    %52 = vector.shape_cast %51 : vector<1x96x128xbf16> to vector<96x128xbf16>
    %53 = vector.shape_cast %50 : vector<96x128xbf16> to vector<1x96x128xbf16>
    tpu.vector_store %arg5[%c0_49, %c0_50, %c0_51], %53 {strides = array<i32>} : memref<1x96x128xbf16, #tpu.memory_space<vmem>>, vector<1x96x128xbf16>,
    return
  }
  func.func @transform_0(%arg0: i32, %arg1: i32) -> i32 {
    %c0_i32 = arith.constant 0 : i32
    %c0_i32_0 = arith.constant 0 : i32
    return %c0_i32 : i32
  }
  func.func @transform_1(%arg0: i32, %arg1: i32) -> (i32, i32) {
    %c0_i32 = arith.constant 0 : i32
    %c0_i32_0 = arith.constant 0 : i32
    %c0_i32_1 = arith.constant 0 : i32
    return %c0_i32, %c0_i32_0 : i32, i32
  }
  func.func @transform_2(%arg0: i32, %arg1: i32) -> (i32, i32, i32, i32) {
    %c0_i32 = arith.constant 0 : i32
    %c0_i32_0 = arith.constant 0 : i32
    %c0_i32_1 = arith.constant 0 : i32
    return %arg0, %c0_i32, %c0_i32_0, %arg1 : i32, i32, i32, i32
  }
  func.func @transform_3(%arg0: i32, %arg1: i32) -> (i32, i32, i32) {
    %c0_i32 = arith.constant 0 : i32
    %c0_i32_0 = arith.constant 0 : i32
    return %arg0, %c0_i32, %arg1 : i32, i32, i32
  }
}

</mosaic_0001>

<llo_original>
// kernel: tpu_custom_call.1
$region0: #{tpu_custom_call.1}
  #allocation0 [shape = 'u32[]', space=smem, size = 0x4, offset = 0x4, fixed_abs, tag = 'smem constant byte address 0x4 - core index']
  #allocation1 [shape = 'u32[144,128]{1,0:T(1,128)}', space=vmem, size = 0x12000, scoped, tag = 'internal scratch']
  #allocation2 [shape = 'f32[1]{0:T(128)S(6)}', space=smem, size = 0x200, scoped, tag = 'scoped memory for tpu_custom_call.1']
  %s0 = inlined_call_operand.<no memory space> [shape: f32[1], index: 0, kind: input, shape index: {}]
  %s1 = inlined_call_operand.vmem [shape: bf16[122,64], index: 1, kind: input, shape index: {}]
  %s2 = inlined_call_operand.hbm [shape: bf16[1,9,64,128], index: 2, kind: input, shape index: {}]
  %s3 = inlined_call_operand.hbm [shape: bf16[1,96,128], index: 3, kind: output, shape index: {}]
  %s4 = sld [smem:[#allocation0]]
  $region26: #{tpu_custom_call.1} parent=0
    _
  %s6 = ssub.s32 1, %s4
  %s7 = scalar_select 0, %s6, %s4
  %8 = sst [smem:[#allocation2]] %s0
  $region1: #{tpu_custom_call.1} parent=0
    #allocation3 [shape = 'u8[147456]{0}', space=vmem, size = 0x24000, scoped, tag = 'input window, operand 2, single buffered']
    #allocation4 [shape = 's32[1]{0}', space=sflag, size = 0x4, scoped, tag = 'scoped memory for tpu_custom_call.1']
    #allocation5 [shape = 's32[1]{0}', space=sflag, size = 0x4, scoped, tag = 'scoped memory for tpu_custom_call.1']
    #allocation6 [shape = 'u8[24576]{0}', space=vmem, size = 0x6000, scoped, tag = 'output window, operand 0, single buffered']
    %9 = vsyncpa [#allocation4], 0
    %10 = vsyncpa [#allocation5], 0
    // Predicated region
    $region2: #{tpu_custom_call.1} parent=1 // pred_check
      _
    $region3: #{tpu_custom_call.1} parent=1 // pred_check_branch
      %12 = sbr.rel (0) target = $region5
    $region4: #{tpu_custom_call.1} parent=1 // pred_region
      _
    $region5: #{tpu_custom_call.1} parent=1 // pred_fallthru
      _
    // Predicated region
    $region6: #{tpu_custom_call.1} parent=1 // pred_check
      _
    $region7: #{tpu_custom_call.1} parent=1 // pred_check_branch
      %14 = sbr.rel (0) target = $region9
    $region8: #{tpu_custom_call.1} parent=1 // pred_region
      _
    $region9: #{tpu_custom_call.1} parent=1 // pred_fallthru
      _
    // Predicated region
    $region10: #{tpu_custom_call.1} parent=1 // pred_check
      _
    $region11: #{tpu_custom_call.1} parent=1 // pred_check_branch
      %16 = sbr.rel (0) target = $region13
    $region12: #{tpu_custom_call.1} parent=1 // pred_region
      %s18 = ssub.s32 4608, 4608
      %19 = vsyncadd [#allocation4], %s18
      %s20 = sshll.u32 [#allocation3], 4
      %s21 = int_to_ptr.vmem [resolvable:$true] %s20
      %26 = dma.hbm_to_vmem [thread:$0]  %s2, 4608, %s21, [#allocation4], 64, 64, 4
    $region13: #{tpu_custom_call.1} parent=1 // pred_fallthru
      _
    // Predicated region
    $region14: #{tpu_custom_call.1} parent=1 // pred_check
      _
    $region15: #{tpu_custom_call.1} parent=1 // pred_check_branch
      %28 = sbr.rel (0) target = $region17
    $region16: #{tpu_custom_call.1} parent=1 // pred_region
      %29 = dma.done [#allocation4], 4608
    $region17: #{tpu_custom_call.1} parent=1 // pred_fallthru
      _
    %v31 = vld [vmem:[%s1] sm:$0xf]
    %v32 = vld [vmem:[%s1 + $0x4] sm:$0xf]
    %v33 = vld [vmem:[%s1 + $0x8] sm:$0xf]
    %v34 = vld [vmem:[%s1 + $0xc] sm:$0xf]
    %v35 = vld [vmem:[%s1 + $0x10] sm:$0xf]
    %v36 = vld [vmem:[%s1 + $0x14] sm:$0xf]
    %v37 = vld [vmem:[%s1 + $0x18] sm:$0xf]
    %v38 = vld [vmem:[%s1 + $0x1c] sm:$0xf]
    %v39 = vld [vmem:[%s1 + $0x20] sm:$0xf]
    %v40 = vld [vmem:[%s1 + $0x24] sm:$0xf]
    %v41 = vld [vmem:[%s1 + $0x28] sm:$0xf]
    %v42 = vld [vmem:[%s1 + $0x2c] sm:$0xf]
    %v43 = vld [vmem:[#allocation3] sm:$0xf]
    %v44 = vld [vmem:[#allocation3 + $0x4] sm:$0xf]
    %v45 = vld [vmem:[#allocation3 + $0x8] sm:$0xf]
    %v46 = vld [vmem:[#allocation3 + $0xc] sm:$0xf]
    %v47 = vld [vmem:[#allocation3 + $0x10] sm:$0xf]
    %v48 = vld [vmem:[#allocation3 + $0x14] sm:$0xf]
    %v49 = vld [vmem:[#allocation3 + $0x18] sm:$0xf]
    %v50 = vld [vmem:[#allocation3 + $0x1c] sm:$0xf]
    %v51 = vld [vmem:[%s1 + $0x30] sm:$0x1]
    %s52 = scalar_lea.vmem [#allocation3], 32
    %v53 = vld [vmem:[%s52] sm:$0xf]
    %v54 = vld [vmem:[%s52 + $0x4] sm:$0xf]
    %v55 = vld [vmem:[%s52 + $0x8] sm:$0xf]
    %v56 = vld [vmem:[%s52 + $0xc] sm:$0xf]
    %v57 = vld [vmem:[%s52 + $0x10] sm:$0xf]
    %v58 = vld [vmem:[%s52 + $0x14] sm:$0xf]
    %v59 = vld [vmem:[%s52 + $0x18] sm:$0xf]
    %v60 = vld [vmem:[%s52 + $0x1c] sm:$0xf]
    %v74 = vunpack.c.l.b16 %v31
    %v75 = vunpack.c.l.b16 %v32
    %v76 = vunpack.c.l.b16 %v33
    %v77 = vunpack.c.l.b16 %v34
    %v78 = vunpack.c.l.b16 %v35
    %v79 = vunpack.c.l.b16 %v36
    %v80 = vunpack.c.l.b16 %v37
    %v81 = vunpack.c.l.b16 %v38
    %v82 = vunpack.c.l.b16 %v39
    %v83 = vunpack.c.l.b16 %v40
    %v84 = vunpack.c.l.b16 %v41
    %v85 = vunpack.c.l.b16 %v42
    %v86 = vunpack.c.l.b16 %v51
    %v87 = vpack.c.b16 %v75, %v74
    %v88 = vpack.c.b16 %v77, %v76
    %v89 = vpack.c.b16 %v79, %v78
    %v90 = vpack.c.b16 %v81, %v80
    %v91 = vpack.c.b16 %v83, %v82
    %v92 = vpack.c.b16 %v85, %v84
    %v93 = vpack.c.b16 %v86, %v86
    %vm94 = vsmask.f32 7424
    %v96 = vshrl.u32 %v87, 16
    %v98 = vshll.u32 %v87, 16
    %v100 = vrot.slane %v98, 1
    %v101 = vor.u32 %v96, %v100
    %v103 = vshll.u32 %v88, 16
    %v105 = vrot.slane %v103, 1
    %v106 = vsel %vm94, %v101, %v105
    %v107 = vshrl.u32 %v88, 16
    %v109 = vor.u32 %v107, %v105
    %v111 = vshll.u32 %v89, 16
    %v113 = vrot.slane %v111, 1
    %v114 = vsel %vm94, %v109, %v113
    %v115 = vshrl.u32 %v89, 16
    %v117 = vor.u32 %v115, %v113
    %v119 = vshll.u32 %v90, 16
    %v121 = vrot.slane %v119, 1
    %v122 = vsel %vm94, %v117, %v121
    %v123 = vshrl.u32 %v90, 16
    %v125 = vor.u32 %v123, %v121
    %v127 = vshll.u32 %v91, 16
    %v129 = vrot.slane %v127, 1
    %v130 = vsel %vm94, %v125, %v129
    %v131 = vshrl.u32 %v91, 16
    %v133 = vor.u32 %v131, %v129
    %v135 = vshll.u32 %v92, 16
    %v137 = vrot.slane %v135, 1
    %v138 = vsel %vm94, %v133, %v137
    %v139 = vshrl.u32 %v92, 16
    %v141 = vor.u32 %v139, %v137
    %v143 = vshll.u32 %v93, 16
    %v145 = vrot.slane %v143, 1
    %v146 = vsel %vm94, %v141, %v145
    %v155 = vunpack.c.l.b16 %v53
    %v156 = vunpack.c.l.b16 %v54
    %v157 = vunpack.c.l.b16 %v55
    %v158 = vunpack.c.l.b16 %v56
    %v159 = vunpack.c.l.b16 %v57
    %v160 = vunpack.c.l.b16 %v58
    %v161 = vunpack.c.l.b16 %v59
    %v162 = vunpack.c.l.b16 %v60
    %v163 = vpack.c.b16 %v156, %v155
    %v164 = vpack.c.b16 %v158, %v157
    %v165 = vpack.c.b16 %v160, %v159
    %v166 = vpack.c.b16 %v162, %v161
    %vm171 = vcmask 523264
    %v173 = vsel %vm171, %v106, 0
    %v176 = vsel %vm171, %v114, 0
    %v179 = vsel %vm171, %v122, 0
    %v182 = vsel %vm171, %v130, 0
    %v185 = vsel %vm171, %v138, 0
    %v188 = vsel %vm171, %v146, 0
    %190 = vmatprep.subr.bf16.mxu0 0
    %191 = vmatpush1.bf16.msra.mxu0 0
    %192 = vmatprep.subr.bf16.mxu0 0
    %193 = vmatpush1.bf16.msra.mxu0 0
    %194 = vmatprep.subr.bf16.mxu0 0
    %195 = vmatpush1.bf16.msra.mxu0 0
    %196 = vmatprep.subr.bf16.mxu0 0
    %197 = vmatpush1.bf16.msra.mxu0 0
    %198 = vmatprep.subr.bf16.mxu0 0
    %199 = vmatpush1.bf16.msra.mxu0 %v166
    %200 = vmatprep.subr.bf16.mxu0 0
    %201 = vmatpush1.bf16.msra.mxu0 %v165
    %202 = vmatprep.subr.bf16.mxu0 0
    %203 = vmatpush1.bf16.msra.mxu0 %v164
    %204 = vmatprep.subr.bf16.mxu0 0
    %205 = vmatpush1.bf16.msra.mxu0 %v163
    %206 = vmatprep.subr.bf16.mxu0 0
    %207 = vmatpush2.bf16.msra.mxu0 0
    %208 = vmatprep.subr.bf16.mxu0 0
    %209 = vmatpush2.bf16.msra.mxu0 0
    %210 = vmatprep.subr.bf16.mxu0 0
    %211 = vmatpush2.bf16.msra.mxu0 0
    %212 = vmatprep.subr.bf16.mxu0 0
    %213 = vmatpush2.bf16.msra.mxu0 0
    %214 = vmatprep.subr.bf16.mxu0 0
    %215 = vmatpush2.bf16.msra.mxu0 0
    %216 = vmatprep.subr.bf16.mxu0 0
    %217 = vmatpush2.bf16.msra.mxu0 0
    %218 = vmatprep.subr.bf16.mxu0 0
    %219 = vmatpush2.bf16.msra.mxu0 0
    %220 = vmatprep.subr.bf16.mxu0 0
    %221 = vmatpush2.bf16.msra.mxu0 0
    %222 = vmatprep.mubr.bf16.mxu0 0
    %223 = vmatmul.mubr.bf16.gmra.mxu0 %v173
    %v224 = vpop.f32.mrf.mxu0
    %v225 = vadd.f32 0.0, %v224
    %v226 = vpop.f32.mrf.mxu0
    %v227 = vpop.f32.mrf.mxu0
    %v228 = vadd.f32 0.0, %v227
    %v229 = vpop.f32.mrf.mxu0
    %230 = vmatprep.mubr.bf16.mxu0 0
    %231 = vmatmul.mubr.bf16.gmra.mxu0 %v176
    %v232 = vpop.f32.mrf.mxu0
    %v233 = vadd.f32 0.0, %v232
    %v234 = vpop.f32.mrf.mxu0
    %v235 = vpop.f32.mrf.mxu0
    %v236 = vadd.f32 0.0, %v235
    %v237 = vpop.f32.mrf.mxu0
    %238 = vmatprep.mubr.bf16.mxu0 0
    %239 = vmatmul.mubr.bf16.gmra.mxu0 %v179
    %v240 = vpop.f32.mrf.mxu0
    %v241 = vadd.f32 0.0, %v240
    %v242 = vpop.f32.mrf.mxu0
    %v243 = vpop.f32.mrf.mxu0
    %v244 = vadd.f32 0.0, %v243
    %v245 = vpop.f32.mrf.mxu0
    %246 = vmatprep.mubr.bf16.mxu0 0
    %247 = vmatmul.mubr.bf16.gmra.mxu0 %v182
    %v248 = vpop.f32.mrf.mxu0
    %v249 = vadd.f32 0.0, %v248
    %v250 = vpop.f32.mrf.mxu0
    %v251 = vpop.f32.mrf.mxu0
    %v252 = vadd.f32 0.0, %v251
    %v253 = vpop.f32.mrf.mxu0
    %254 = vmatprep.mubr.bf16.mxu0 0
    %255 = vmatmul.mubr.bf16.gmra.mxu0 %v185
    %v256 = vpop.f32.mrf.mxu0
    %v257 = vadd.f32 0.0, %v256
    %v258 = vpop.f32.mrf.mxu0
    %v259 = vpop.f32.mrf.mxu0
    %v260 = vadd.f32 0.0, %v259
    %v261 = vpop.f32.mrf.mxu0
    %262 = vmatprep.mubr.bf16.mxu0 0
    %263 = vmatmul.mubr.bf16.gmra.mxu0 %v188
    %v264 = vpop.f32.mrf.mxu0
    %v265 = vadd.f32 0.0, %v264
    %v266 = vpop.f32.mrf.mxu0
    %v267 = vpop.f32.mrf.mxu0
    %v268 = vadd.f32 0.0, %v267
    %v269 = vpop.f32.mrf.mxu0
    %270 = vdwg.mxu0
    %v279 = vunpack.c.l.b16 %v43
    %v280 = vunpack.c.l.b16 %v44
    %v281 = vunpack.c.l.b16 %v45
    %v282 = vunpack.c.l.b16 %v46
    %v283 = vunpack.c.l.b16 %v47
    %v284 = vunpack.c.l.b16 %v48
    %v285 = vunpack.c.l.b16 %v49
    %v286 = vunpack.c.l.b16 %v50
    %v287 = vpack.c.b16 %v280, %v279
    %v288 = vpack.c.b16 %v282, %v281
    %v289 = vpack.c.b16 %v284, %v283
    %v290 = vpack.c.b16 %v286, %v285
    %v295 = vsel %vm171, %v87, 0
    %v297 = vsel %vm171, %v88, 0
    %v299 = vsel %vm171, %v89, 0
    %v301 = vsel %vm171, %v90, 0
    %v303 = vsel %vm171, %v91, 0
    %v305 = vsel %vm171, %v92, 0
    %307 = vmatprep.subr.bf16.mxu0 0
    %308 = vmatpush1.bf16.msra.mxu0 0
    %309 = vmatprep.subr.bf16.mxu0 0
    %310 = vmatpush1.bf16.msra.mxu0 0
    %311 = vmatprep.subr.bf16.mxu0 0
    %312 = vmatpush1.bf16.msra.mxu0 0
    %313 = vmatprep.subr.bf16.mxu0 0
    %314 = vmatpush1.bf16.msra.mxu0 0
    %315 = vmatprep.subr.bf16.mxu0 0
    %316 = vmatpush1.bf16.msra.mxu0 %v290
    %317 = vmatprep.subr.bf16.mxu0 0
    %318 = vmatpush1.bf16.msra.mxu0 %v289
    %319 = vmatprep.subr.bf16.mxu0 0
    %320 = vmatpush1.bf16.msra.mxu0 %v288
    %321 = vmatprep.subr.bf16.mxu0 0
    %322 = vmatpush1.bf16.msra.mxu0 %v287
    %323 = vmatprep.subr.bf16.mxu0 0
    %324 = vmatpush2.bf16.msra.mxu0 0
    %325 = vmatprep.subr.bf16.mxu0 0
    %326 = vmatpush2.bf16.msra.mxu0 0
    %327 = vmatprep.subr.bf16.mxu0 0
    %328 = vmatpush2.bf16.msra.mxu0 0
    %329 = vmatprep.subr.bf16.mxu0 0
    %330 = vmatpush2.bf16.msra.mxu0 0
    %331 = vmatprep.subr.bf16.mxu0 0
    %332 = vmatpush2.bf16.msra.mxu0 0
    %333 = vmatprep.subr.bf16.mxu0 0
    %334 = vmatpush2.bf16.msra.mxu0 0
    %335 = vmatprep.subr.bf16.mxu0 0
    %336 = vmatpush2.bf16.msra.mxu0 0
    %337 = vmatprep.subr.bf16.mxu0 0
    %338 = vmatpush2.bf16.msra.mxu0 0
    %339 = vmatprep.mubr.bf16.mxu0 0
    %340 = vmatmul.mubr.bf16.gmra.mxu0 %v295
    %v341 = vpop.f32.mrf.mxu0
    %v342 = vadd.f32 %v225, %v341
    %v343 = vpop.f32.mrf.mxu0
    %v344 = vpop.f32.mrf.mxu0
    %v345 = vadd.f32 %v228, %v344
    %v346 = vpop.f32.mrf.mxu0
    %347 = vmatprep.mubr.bf16.mxu0 0
    %348 = vmatmul.mubr.bf16.gmra.mxu0 %v297
    %v349 = vpop.f32.mrf.mxu0
    %v350 = vadd.f32 %v233, %v349
    %v351 = vpop.f32.mrf.mxu0
    %v352 = vpop.f32.mrf.mxu0
    %v353 = vadd.f32 %v236, %v352
    %v354 = vpop.f32.mrf.mxu0
    %355 = vmatprep.mubr.bf16.mxu0 0
    %356 = vmatmul.mubr.bf16.gmra.mxu0 %v299
    %v357 = vpop.f32.mrf.mxu0
    %v358 = vadd.f32 %v241, %v357
    %v359 = vpop.f32.mrf.mxu0
    %v360 = vpop.f32.mrf.mxu0
    %v361 = vadd.f32 %v244, %v360
    %v362 = vpop.f32.mrf.mxu0
    %363 = vmatprep.mubr.bf16.mxu0 0
    %364 = vmatmul.mubr.bf16.gmra.mxu0 %v301
    %v365 = vpop.f32.mrf.mxu0
    %v366 = vadd.f32 %v249, %v365
    %v367 = vpop.f32.mrf.mxu0
    %v368 = vpop.f32.mrf.mxu0
    %v369 = vadd.f32 %v252, %v368
    %v370 = vpop.f32.mrf.mxu0
    %371 = vmatprep.mubr.bf16.mxu0 0
    %372 = vmatmul.mubr.bf16.gmra.mxu0 %v303
    %v373 = vpop.f32.mrf.mxu0
    %v374 = vadd.f32 %v257, %v373
    %v375 = vpop.f32.mrf.mxu0
    %v376 = vpop.f32.mrf.mxu0
    %v377 = vadd.f32 %v260, %v376
    %v378 = vpop.f32.mrf.mxu0
    %379 = vmatprep.mubr.bf16.mxu0 0
    %380 = vmatmul.mubr.bf16.gmra.mxu0 %v305
    %v381 = vpop.f32.mrf.mxu0
    %v382 = vadd.f32 %v265, %v381
    %v383 = vpop.f32.mrf.mxu0
    %v384 = vpop.f32.mrf.mxu0
    %v385 = vadd.f32 %v268, %v384
    %v386 = vpop.f32.mrf.mxu0
    %387 = vdwg.mxu0
    %v388 = vld [vmem:[%s1] sm:$0xe]
    %s389 = scalar_lea.vmem [#allocation3], 64
    %v390 = vld [vmem:[%s389] sm:$0xf]
    %v391 = vld [vmem:[%s389 + $0x4] sm:$0xf]
    %v392 = vld [vmem:[%s389 + $0x8] sm:$0xf]
    %v393 = vld [vmem:[%s389 + $0xc] sm:$0xf]
    %v394 = vld [vmem:[%s389 + $0x10] sm:$0xf]
    %v395 = vld [vmem:[%s389 + $0x14] sm:$0xf]
    %v396 = vld [vmem:[%s389 + $0x18] sm:$0xf]
    %v397 = vld [vmem:[%s389 + $0x1c] sm:$0xf]
    %v399 = vunpack.c.l.b16 %v388
    %v400 = vpack.c.b16 %v75, %v399
    %vm401 = vcmask 1046528
    %v402 = vrot.slane %v400, 1
    %v403 = vrot.slane %v88, 1
    %v404 = vsel %vm401, %v402, %v403
    %v405 = vrot.slane %v89, 1
    %v406 = vsel %vm401, %v403, %v405
    %v407 = vrot.slane %v90, 1
    %v408 = vsel %vm401, %v405, %v407
    %v409 = vrot.slane %v91, 1
    %v410 = vsel %vm401, %v407, %v409
    %v411 = vrot.slane %v92, 1
    %v412 = vsel %vm401, %v409, %v411
    %v413 = vrot.slane %v93, 1
    %v414 = vsel %vm401, %v411, %v413
    %v423 = vunpack.c.l.b16 %v390
    %v424 = vunpack.c.l.b16 %v391
    %v425 = vunpack.c.l.b16 %v392
    %v426 = vunpack.c.l.b16 %v393
    %v427 = vunpack.c.l.b16 %v394
    %v428 = vunpack.c.l.b16 %v395
    %v429 = vunpack.c.l.b16 %v396
    %v430 = vunpack.c.l.b16 %v397
    %v431 = vpack.c.b16 %v424, %v423
    %v432 = vpack.c.b16 %v426, %v425
    %v433 = vpack.c.b16 %v428, %v427
    %v434 = vpack.c.b16 %v430, %v429
    %v440 = vsel %vm171, %v404, 0
    %v443 = vsel %vm171, %v406, 0
    %v446 = vsel %vm171, %v408, 0
    %v449 = vsel %vm171, %v410, 0
    %v452 = vsel %vm171, %v412, 0
    %v455 = vsel %vm171, %v414, 0
    %457 = vmatprep.subr.bf16.mxu0 0
    %458 = vmatpush1.bf16.msra.mxu0 0
    %459 = vmatprep.subr.bf16.mxu0 0
    %460 = vmatpush1.bf16.msra.mxu0 0
    %461 = vmatprep.subr.bf16.mxu0 0
    %462 = vmatpush1.bf16.msra.mxu0 0
    %463 = vmatprep.subr.bf16.mxu0 0
    %464 = vmatpush1.bf16.msra.mxu0 0
    %465 = vmatprep.subr.bf16.mxu0 0
    %466 = vmatpush1.bf16.msra.mxu0 %v434
    %467 = vmatprep.subr.bf16.mxu0 0
    %468 = vmatpush1.bf16.msra.mxu0 %v433
    %469 = vmatprep.subr.bf16.mxu0 0
    %470 = vmatpush1.bf16.msra.mxu0 %v432
    %471 = vmatprep.subr.bf16.mxu0 0
    %472 = vmatpush1.bf16.msra.mxu0 %v431
    %473 = vmatprep.subr.bf16.mxu0 0
    %474 = vmatpush2.bf16.msra.mxu0 0
    %475 = vmatprep.subr.bf16.mxu0 0
    %476 = vmatpush2.bf16.msra.mxu0 0
    %477 = vmatprep.subr.bf16.mxu0 0
    %478 = vmatpush2.bf16.msra.mxu0 0
    %479 = vmatprep.subr.bf16.mxu0 0
    %480 = vmatpush2.bf16.msra.mxu0 0
    %481 = vmatprep.subr.bf16.mxu0 0
    %482 = vmatpush2.bf16.msra.mxu0 0
    %483 = vmatprep.subr.bf16.mxu0 0
    %484 = vmatpush2.bf16.msra.mxu0 0
    %485 = vmatprep.subr.bf16.mxu0 0
    %486 = vmatpush2.bf16.msra.mxu0 0
    %487 = vmatprep.subr.bf16.mxu0 0
    %488 = vmatpush2.bf16.msra.mxu0 0
    %489 = vmatprep.mubr.bf16.mxu0 0
    %490 = vmatmul.mubr.bf16.gmra.mxu0 %v440
    %v491 = vpop.f32.mrf.mxu0
    %v492 = vadd.f32 0.0, %v491
    %v493 = vpop.f32.mrf.mxu0
    %v494 = vpop.f32.mrf.mxu0
    %v495 = vadd.f32 0.0, %v494
    %v496 = vpop.f32.mrf.mxu0
    %497 = vmatprep.mubr.bf16.mxu0 0
    %498 = vmatmul.mubr.bf16.gmra.mxu0 %v443
    %v499 = vpop.f32.mrf.mxu0
    %v500 = vadd.f32 0.0, %v499
    %v501 = vpop.f32.mrf.mxu0
    %v502 = vpop.f32.mrf.mxu0
    %v503 = vadd.f32 0.0, %v502
    %v504 = vpop.f32.mrf.mxu0
    %505 = vmatprep.mubr.bf16.mxu0 0
    %506 = vmatmul.mubr.bf16.gmra.mxu0 %v446
    %v507 = vpop.f32.mrf.mxu0
    %v508 = vadd.f32 0.0, %v507
    %v509 = vpop.f32.mrf.mxu0
    %v510 = vpop.f32.mrf.mxu0
    %v511 = vadd.f32 0.0, %v510
    %v512 = vpop.f32.mrf.mxu0
    %513 = vmatprep.mubr.bf16.mxu0 0
    %514 = vmatmul.mubr.bf16.gmra.mxu0 %v449
    %v515 = vpop.f32.mrf.mxu0
    %v516 = vadd.f32 0.0, %v515
    %v517 = vpop.f32.mrf.mxu0
    %v518 = vpop.f32.mrf.mxu0
    %v519 = vadd.f32 0.0, %v518
    %v520 = vpop.f32.mrf.mxu0
    %521 = vmatprep.mubr.bf16.mxu0 0
    %522 = vmatmul.mubr.bf16.gmra.mxu0 %v452
    %v523 = vpop.f32.mrf.mxu0
    %v524 = vadd.f32 0.0, %v523
    %v525 = vpop.f32.mrf.mxu0
    %v526 = vpop.f32.mrf.mxu0
    %v527 = vadd.f32 0.0, %v526
    %v528 = vpop.f32.mrf.mxu0
    %529 = vmatprep.mubr.bf16.mxu0 0
    %530 = vmatmul.mubr.bf16.gmra.mxu0 %v455
    %v531 = vpop.f32.mrf.mxu0
    %v532 = vadd.f32 0.0, %v531
    %v533 = vpop.f32.mrf.mxu0
    %v534 = vpop.f32.mrf.mxu0
    %v535 = vadd.f32 0.0, %v534
    %v536 = vpop.f32.mrf.mxu0
    %537 = vdwg.mxu0
    %v538 = vadd.f32 %v342, %v492
    %v539 = vadd.f32 %v345, %v495
    %v540 = vadd.f32 %v350, %v500
    %v541 = vadd.f32 %v353, %v503
    %v542 = vadd.f32 %v358, %v508
    %v543 = vadd.f32 %v361, %v511
    %v544 = vadd.f32 %v366, %v516
    %v545 = vadd.f32 %v369, %v519
    %v546 = vadd.f32 %v374, %v524
    %v547 = vadd.f32 %v377, %v527
    %v548 = vadd.f32 %v382, %v532
    %v549 = vadd.f32 %v385, %v535
    %v550 = vld [vmem:[%s1 + $0x4] sm:$0xc]
    %v551 = vld [vmem:[%s1 + $0x8] sm:$0xf]
    %v552 = vld [vmem:[%s1 + $0xc] sm:$0xf]
    %v553 = vld [vmem:[%s1 + $0x10] sm:$0xf]
    %v554 = vld [vmem:[%s1 + $0x14] sm:$0xf]
    %v555 = vld [vmem:[%s1 + $0x18] sm:$0xf]
    %v556 = vld [vmem:[%s1 + $0x1c] sm:$0xf]
    %v557 = vld [vmem:[%s1 + $0x20] sm:$0xf]
    %v558 = vld [vmem:[%s1 + $0x24] sm:$0xf]
    %v559 = vld [vmem:[%s1 + $0x28] sm:$0xf]
    %v560 = vld [vmem:[%s1 + $0x2c] sm:$0xf]
    %v561 = vld [vmem:[%s1 + $0x30] sm:$0xf]
    %v562 = vld [vmem:[%s1 + $0x34] sm:$0x3]
    %s563 = scalar_lea.vmem [#allocation3], 96
    %v564 = vld [vmem:[%s563] sm:$0xf]
    %v565 = vld [vmem:[%s563 + $0x4] sm:$0xf]
    %v566 = vld [vmem:[%s563 + $0x8] sm:$0xf]
    %v567 = vld [vmem:[%s563 + $0xc] sm:$0xf]
    %v568 = vld [vmem:[%s563 + $0x10] sm:$0xf]
    %v569 = vld [vmem:[%s563 + $0x14] sm:$0xf]
    %v570 = vld [vmem:[%s563 + $0x18] sm:$0xf]
    %v571 = vld [vmem:[%s563 + $0x1c] sm:$0xf]
    %v585 = vunpack.c.l.b16 %v550
    %v586 = vunpack.c.l.b16 %v551
    %v587 = vunpack.c.l.b16 %v552
    %v588 = vunpack.c.l.b16 %v553
    %v589 = vunpack.c.l.b16 %v554
    %v590 = vunpack.c.l.b16 %v555
    %v591 = vunpack.c.l.b16 %v556
    %v592 = vunpack.c.l.b16 %v557
    %v593 = vunpack.c.l.b16 %v558
    %v594 = vunpack.c.l.b16 %v559
    %v595 = vunpack.c.l.b16 %v560
    %v596 = vunpack.c.l.b16 %v561
    %v597 = vunpack.c.l.b16 %v562
    %v598 = vpack.c.b16 %v586, %v585
    %v599 = vpack.c.b16 %v588, %v587
    %v600 = vpack.c.b16 %v590, %v589
    %v601 = vpack.c.b16 %v592, %v591
    %v602 = vpack.c.b16 %v594, %v593
    %v603 = vpack.c.b16 %v596, %v595
    %v604 = vpack.c.b16 %v597, %v597
    %vm605 = vcmask 1045504
    %v606 = vrot.slane %v598, 2
    %v607 = vrot.slane %v599, 2
    %v608 = vsel %vm605, %v606, %v607
    %v609 = vrot.slane %v600, 2
    %v610 = vsel %vm605, %v607, %v609
    %v611 = vrot.slane %v601, 2
    %v612 = vsel %vm605, %v609, %v611
    %v613 = vrot.slane %v602, 2
    %v614 = vsel %vm605, %v611, %v613
    %v615 = vrot.slane %v603, 2
    %v616 = vsel %vm605, %v613, %v615
    %v617 = vrot.slane %v604, 2
    %v618 = vsel %vm605, %v615, %v617
    %v627 = vunpack.c.l.b16 %v564
    %v628 = vunpack.c.l.b16 %v565
    %v629 = vunpack.c.l.b16 %v566
    %v630 = vunpack.c.l.b16 %v567
    %v631 = vunpack.c.l.b16 %v568
    %v632 = vunpack.c.l.b16 %v569
    %v633 = vunpack.c.l.b16 %v570
    %v634 = vunpack.c.l.b16 %v571
    %v635 = vpack.c.b16 %v628, %v627
    %v636 = vpack.c.b16 %v630, %v629
    %v637 = vpack.c.b16 %v632, %v631
    %v638 = vpack.c.b16 %v634, %v633
    %v644 = vsel %vm171, %v608, 0
    %v647 = vsel %vm171, %v610, 0
    %v650 = vsel %vm171, %v612, 0
    %v653 = vsel %vm171, %v614, 0
    %v656 = vsel %vm171, %v616, 0
    %v659 = vsel %vm171, %v618, 0
    %661 = vmatprep.subr.bf16.mxu0 0
    %662 = vmatpush1.bf16.msra.mxu0 0
    %663 = vmatprep.subr.bf16.mxu0 0
    %664 = vmatpush1.bf16.msra.mxu0 0
    %665 = vmatprep.subr.bf16.mxu0 0
    %666 = vmatpush1.bf16.msra.mxu0 0
    %667 = vmatprep.subr.bf16.mxu0 0
    %668 = vmatpush1.bf16.msra.mxu0 0
    %669 = vmatprep.subr.bf16.mxu0 0
    %670 = vmatpush1.bf16.msra.mxu0 %v638
    %671 = vmatprep.subr.bf16.mxu0 0
    %672 = vmatpush1.bf16.msra.mxu0 %v637
    %673 = vmatprep.subr.bf16.mxu0 0
    %674 = vmatpush1.bf16.msra.mxu0 %v636
    %675 = vmatprep.subr.bf16.mxu0 0
    %676 = vmatpush1.bf16.msra.mxu0 %v635
    %677 = vmatprep.subr.bf16.mxu0 0
    %678 = vmatpush2.bf16.msra.mxu0 0
    %679 = vmatprep.subr.bf16.mxu0 0
    %680 = vmatpush2.bf16.msra.mxu0 0
    %681 = vmatprep.subr.bf16.mxu0 0
    %682 = vmatpush2.bf16.msra.mxu0 0
    %683 = vmatprep.subr.bf16.mxu0 0
    %684 = vmatpush2.bf16.msra.mxu0 0
    %685 = vmatprep.subr.bf16.mxu0 0
    %686 = vmatpush2.bf16.msra.mxu0 0
    %687 = vmatprep.subr.bf16.mxu0 0
    %688 = vmatpush2.bf16.msra.mxu0 0
    %689 = vmatprep.subr.bf16.mxu0 0
    %690 = vmatpush2.bf16.msra.mxu0 0
    %691 = vmatprep.subr.bf16.mxu0 0
    %692 = vmatpush2.bf16.msra.mxu0 0
    %693 = vmatprep.mubr.bf16.mxu0 0
    %694 = vmatmul.mubr.bf16.gmra.mxu0 %v644
    %v695 = vpop.f32.mrf.mxu0
    %v696 = vadd.f32 0.0, %v695
    %v697 = vpop.f32.mrf.mxu0
    %v698 = vpop.f32.mrf.mxu0
    %v699 = vadd.f32 0.0, %v698
    %v700 = vpop.f32.mrf.mxu0
    %701 = vmatprep.mubr.bf16.mxu0 0
    %702 = vmatmul.mubr.bf16.gmra.mxu0 %v647
    %v703 = vpop.f32.mrf.mxu0
    %v704 = vadd.f32 0.0, %v703
    %v705 = vpop.f32.mrf.mxu0
    %v706 = vpop.f32.mrf.mxu0
    %v707 = vadd.f32 0.0, %v706
    %v708 = vpop.f32.mrf.mxu0
    %709 = vmatprep.mubr.bf16.mxu0 0
    %710 = vmatmul.mubr.bf16.gmra.mxu0 %v650
    %v711 = vpop.f32.mrf.mxu0
    %v712 = vadd.f32 0.0, %v711
    %v713 = vpop.f32.mrf.mxu0
    %v714 = vpop.f32.mrf.mxu0
    %v715 = vadd.f32 0.0, %v714
    %v716 = vpop.f32.mrf.mxu0
    %717 = vmatprep.mubr.bf16.mxu0 0
    %718 = vmatmul.mubr.bf16.gmra.mxu0 %v653
    %v719 = vpop.f32.mrf.mxu0
    %v720 = vadd.f32 0.0, %v719
    %v721 = vpop.f32.mrf.mxu0
    %v722 = vpop.f32.mrf.mxu0
    %v723 = vadd.f32 0.0, %v722
    %v724 = vpop.f32.mrf.mxu0
    %725 = vmatprep.mubr.bf16.mxu0 0
    %726 = vmatmul.mubr.bf16.gmra.mxu0 %v656
    %v727 = vpop.f32.mrf.mxu0
    %v728 = vadd.f32 0.0, %v727
    %v729 = vpop.f32.mrf.mxu0
    %v730 = vpop.f32.mrf.mxu0
    %v731 = vadd.f32 0.0, %v730
    %v732 = vpop.f32.mrf.mxu0
    %733 = vmatprep.mubr.bf16.mxu0 0
    %734 = vmatmul.mubr.bf16.gmra.mxu0 %v659
    %v735 = vpop.f32.mrf.mxu0
    %v736 = vadd.f32 0.0, %v735
    %v737 = vpop.f32.mrf.mxu0
    %v738 = vpop.f32.mrf.mxu0
    %v739 = vadd.f32 0.0, %v738
    %v740 = vpop.f32.mrf.mxu0
    %741 = vdwg.mxu0
    %v742 = vadd.f32 %v538, %v696
    %v743 = vadd.f32 %v539, %v699
    %v744 = vadd.f32 %v540, %v704
    %v745 = vadd.f32 %v541, %v707
    %v746 = vadd.f32 %v542, %v712
    %v747 = vadd.f32 %v543, %v715
    %v748 = vadd.f32 %v544, %v720
    %v749 = vadd.f32 %v545, %v723
    %v750 = vadd.f32 %v546, %v728
    %v751 = vadd.f32 %v547, %v731
    %v752 = vadd.f32 %v548, %v736
    %v753 = vadd.f32 %v549, %v739
    %v754 = vld [vmem:[%s1 + $0x34] sm:$0x7]
    %s755 = scalar_lea.vmem [#allocation3], 128
    %v756 = vld [vmem:[%s755] sm:$0xf]
    %v757 = vld [vmem:[%s755 + $0x4] sm:$0xf]
    %v758 = vld [vmem:[%s755 + $0x8] sm:$0xf]
    %v759 = vld [vmem:[%s755 + $0xc] sm:$0xf]
    %v760 = vld [vmem:[%s755 + $0x10] sm:$0xf]
    %v761 = vld [vmem:[%s755 + $0x14] sm:$0xf]
    %v762 = vld [vmem:[%s755 + $0x18] sm:$0xf]
    %v763 = vld [vmem:[%s755 + $0x1c] sm:$0xf]
    %v765 = vunpack.c.l.b16 %v754
    %v766 = vpack.c.b16 %v765, %v765
    %vm767 = vsmask.f32 5376
    %v769 = vshrl.u32 %v598, 16
    %v771 = vrot.slane %v769, 2
    %v772 = vshll.u32 %v598, 16
    %v774 = vrot.slane %v772, 3
    %v775 = vor.u32 %v771, %v774
    %v777 = vshrl.u32 %v599, 16
    %v779 = vrot.slane %v777, 2
    %v780 = vshll.u32 %v599, 16
    %v782 = vrot.slane %v780, 3
    %v783 = vor.u32 %v779, %v782
    %v784 = vsel %vm767, %v775, %v783
    %v786 = vshrl.u32 %v600, 16
    %v788 = vrot.slane %v786, 2
    %v789 = vshll.u32 %v600, 16
    %v791 = vrot.slane %v789, 3
    %v792 = vor.u32 %v788, %v791
    %v793 = vsel %vm767, %v783, %v792
    %v795 = vshrl.u32 %v601, 16
    %v797 = vrot.slane %v795, 2
    %v798 = vshll.u32 %v601, 16
    %v800 = vrot.slane %v798, 3
    %v801 = vor.u32 %v797, %v800
    %v802 = vsel %vm767, %v792, %v801
    %v804 = vshrl.u32 %v602, 16
    %v806 = vrot.slane %v804, 2
    %v807 = vshll.u32 %v602, 16
    %v809 = vrot.slane %v807, 3
    %v810 = vor.u32 %v806, %v809
    %v811 = vsel %vm767, %v801, %v810
    %v813 = vshrl.u32 %v603, 16
    %v815 = vrot.slane %v813, 2
    %v816 = vshll.u32 %v603, 16
    %v818 = vrot.slane %v816, 3
    %v819 = vor.u32 %v815, %v818
    %v820 = vsel %vm767, %v810, %v819
    %v822 = vshrl.u32 %v766, 16
    %v824 = vrot.slane %v822, 2
    %v825 = vshll.u32 %v766, 16
    %v827 = vrot.slane %v825, 3
    %v828 = vor.u32 %v824, %v827
    %v829 = vsel %vm767, %v819, %v828
    %v838 = vunpack.c.l.b16 %v756
    %v839 = vunpack.c.l.b16 %v757
    %v840 = vunpack.c.l.b16 %v758
    %v841 = vunpack.c.l.b16 %v759
    %v842 = vunpack.c.l.b16 %v760
    %v843 = vunpack.c.l.b16 %v761
    %v844 = vunpack.c.l.b16 %v762
    %v845 = vunpack.c.l.b16 %v763
    %v846 = vpack.c.b16 %v839, %v838
    %v847 = vpack.c.b16 %v841, %v840
    %v848 = vpack.c.b16 %v843, %v842
    %v849 = vpack.c.b16 %v845, %v844
    %v855 = vsel %vm171, %v784, 0
    %v858 = vsel %vm171, %v793, 0
    %v861 = vsel %vm171, %v802, 0
    %v864 = vsel %vm171, %v811, 0
    %v867 = vsel %vm171, %v820, 0
    %v870 = vsel %vm171, %v829, 0
    %872 = vmatprep.subr.bf16.mxu0 0
    %873 = vmatpush1.bf16.msra.mxu0 0
    %874 = vmatprep.subr.bf16.mxu0 0
    %875 = vmatpush1.bf16.msra.mxu0 0
    %876 = vmatprep.subr.bf16.mxu0 0
    %877 = vmatpush1.bf16.msra.mxu0 0
    %878 = vmatprep.subr.bf16.mxu0 0
    %879 = vmatpush1.bf16.msra.mxu0 0
    %880 = vmatprep.subr.bf16.mxu0 0
    %881 = vmatpush1.bf16.msra.mxu0 %v849
    %882 = vmatprep.subr.bf16.mxu0 0
    %883 = vmatpush1.bf16.msra.mxu0 %v848
    %884 = vmatprep.subr.bf16.mxu0 0
    %885 = vmatpush1.bf16.msra.mxu0 %v847
    %886 = vmatprep.subr.bf16.mxu0 0
    %887 = vmatpush1.bf16.msra.mxu0 %v846
    %888 = vmatprep.subr.bf16.mxu0 0
    %889 = vmatpush2.bf16.msra.mxu0 0
    %890 = vmatprep.subr.bf16.mxu0 0
    %891 = vmatpush2.bf16.msra.mxu0 0
    %892 = vmatprep.subr.bf16.mxu0 0
    %893 = vmatpush2.bf16.msra.mxu0 0
    %894 = vmatprep.subr.bf16.mxu0 0
    %895 = vmatpush2.bf16.msra.mxu0 0
    %896 = vmatprep.subr.bf16.mxu0 0
    %897 = vmatpush2.bf16.msra.mxu0 0
    %898 = vmatprep.subr.bf16.mxu0 0
    %899 = vmatpush2.bf16.msra.mxu0 0
    %900 = vmatprep.subr.bf16.mxu0 0
    %901 = vmatpush2.bf16.msra.mxu0 0
    %902 = vmatprep.subr.bf16.mxu0 0
    %903 = vmatpush2.bf16.msra.mxu0 0
    %904 = vmatprep.mubr.bf16.mxu0 0
    %905 = vmatmul.mubr.bf16.gmra.mxu0 %v855
    %v906 = vpop.f32.mrf.mxu0
    %v907 = vadd.f32 0.0, %v906
    %v908 = vpop.f32.mrf.mxu0
    %v909 = vpop.f32.mrf.mxu0
    %v910 = vadd.f32 0.0, %v909
    %v911 = vpop.f32.mrf.mxu0
    %912 = vmatprep.mubr.bf16.mxu0 0
    %913 = vmatmul.mubr.bf16.gmra.mxu0 %v858
    %v914 = vpop.f32.mrf.mxu0
    %v915 = vadd.f32 0.0, %v914
    %v916 = vpop.f32.mrf.mxu0
    %v917 = vpop.f32.mrf.mxu0
    %v918 = vadd.f32 0.0, %v917
    %v919 = vpop.f32.mrf.mxu0
    %920 = vmatprep.mubr.bf16.mxu0 0
    %921 = vmatmul.mubr.bf16.gmra.mxu0 %v861
    %v922 = vpop.f32.mrf.mxu0
    %v923 = vadd.f32 0.0, %v922
    %v924 = vpop.f32.mrf.mxu0
    %v925 = vpop.f32.mrf.mxu0
    %v926 = vadd.f32 0.0, %v925
    %v927 = vpop.f32.mrf.mxu0
    %928 = vmatprep.mubr.bf16.mxu0 0
    %929 = vmatmul.mubr.bf16.gmra.mxu0 %v864
    %v930 = vpop.f32.mrf.mxu0
    %v931 = vadd.f32 0.0, %v930
    %v932 = vpop.f32.mrf.mxu0
    %v933 = vpop.f32.mrf.mxu0
    %v934 = vadd.f32 0.0, %v933
    %v935 = vpop.f32.mrf.mxu0
    %936 = vmatprep.mubr.bf16.mxu0 0
    %937 = vmatmul.mubr.bf16.gmra.mxu0 %v867
    %v938 = vpop.f32.mrf.mxu0
    %v939 = vadd.f32 0.0, %v938
    %v940 = vpop.f32.mrf.mxu0
    %v941 = vpop.f32.mrf.mxu0
    %v942 = vadd.f32 0.0, %v941
    %v943 = vpop.f32.mrf.mxu0
    %944 = vmatprep.mubr.bf16.mxu0 0
    %945 = vmatmul.mubr.bf16.gmra.mxu0 %v870
    %v946 = vpop.f32.mrf.mxu0
    %v947 = vadd.f32 0.0, %v946
    %v948 = vpop.f32.mrf.mxu0
    %v949 = vpop.f32.mrf.mxu0
    %v950 = vadd.f32 0.0, %v949
    %v951 = vpop.f32.mrf.mxu0
    %952 = vdwg.mxu0
    %v953 = vadd.f32 %v742, %v907
    %v954 = vadd.f32 %v743, %v910
    %v955 = vadd.f32 %v744, %v915
    %v956 = vadd.f32 %v745, %v918
    %v957 = vadd.f32 %v746, %v923
    %v958 = vadd.f32 %v747, %v926
    %v959 = vadd.f32 %v748, %v931
    %v960 = vadd.f32 %v749, %v934
    %v961 = vadd.f32 %v750, %v939
    %v962 = vadd.f32 %v751, %v942
    %v963 = vadd.f32 %v752, %v947
    %v964 = vadd.f32 %v753, %v950
    %v965 = vld [vmem:[%s1 + $0x4] sm:$0x8]
    %s966 = scalar_lea.vmem [#allocation3], 160
    %v967 = vld [vmem:[%s966] sm:$0xf]
    %v968 = vld [vmem:[%s966 + $0x4] sm:$0xf]
    %v969 = vld [vmem:[%s966 + $0x8] sm:$0xf]
    %v970 = vld [vmem:[%s966 + $0xc] sm:$0xf]
    %v971 = vld [vmem:[%s966 + $0x10] sm:$0xf]
    %v972 = vld [vmem:[%s966 + $0x14] sm:$0xf]
    %v973 = vld [vmem:[%s966 + $0x18] sm:$0xf]
    %v974 = vld [vmem:[%s966 + $0x1c] sm:$0xf]
    %v976 = vunpack.c.l.b16 %v965
    %v977 = vpack.c.b16 %v586, %v976
    %vm978 = vcmask 1044480
    %v979 = vrot.slane %v977, 3
    %v980 = vrot.slane %v599, 3
    %v981 = vsel %vm978, %v979, %v980
    %v982 = vrot.slane %v600, 3
    %v983 = vsel %vm978, %v980, %v982
    %v984 = vrot.slane %v601, 3
    %v985 = vsel %vm978, %v982, %v984
    %v986 = vrot.slane %v602, 3
    %v987 = vsel %vm978, %v984, %v986
    %v988 = vrot.slane %v603, 3
    %v989 = vsel %vm978, %v986, %v988
    %v990 = vrot.slane %v766, 3
    %v991 = vsel %vm978, %v988, %v990
    %v1000 = vunpack.c.l.b16 %v967
    %v1001 = vunpack.c.l.b16 %v968
    %v1002 = vunpack.c.l.b16 %v969
    %v1003 = vunpack.c.l.b16 %v970
    %v1004 = vunpack.c.l.b16 %v971
    %v1005 = vunpack.c.l.b16 %v972
    %v1006 = vunpack.c.l.b16 %v973
    %v1007 = vunpack.c.l.b16 %v974
    %v1008 = vpack.c.b16 %v1001, %v1000
    %v1009 = vpack.c.b16 %v1003, %v1002
    %v1010 = vpack.c.b16 %v1005, %v1004
    %v1011 = vpack.c.b16 %v1007, %v1006
    %v1017 = vsel %vm171, %v981, 0
    %v1020 = vsel %vm171, %v983, 0
    %v1023 = vsel %vm171, %v985, 0
    %v1026 = vsel %vm171, %v987, 0
    %v1029 = vsel %vm171, %v989, 0
    %v1032 = vsel %vm171, %v991, 0
    %1034 = vmatprep.subr.bf16.mxu0 0
    %1035 = vmatpush1.bf16.msra.mxu0 0
    %1036 = vmatprep.subr.bf16.mxu0 0
    %1037 = vmatpush1.bf16.msra.mxu0 0
    %1038 = vmatprep.subr.bf16.mxu0 0
    %1039 = vmatpush1.bf16.msra.mxu0 0
    %1040 = vmatprep.subr.bf16.mxu0 0
    %1041 = vmatpush1.bf16.msra.mxu0 0
    %1042 = vmatprep.subr.bf16.mxu0 0
    %1043 = vmatpush1.bf16.msra.mxu0 %v1011
    %1044 = vmatprep.subr.bf16.mxu0 0
    %1045 = vmatpush1.bf16.msra.mxu0 %v1010
    %1046 = vmatprep.subr.bf16.mxu0 0
    %1047 = vmatpush1.bf16.msra.mxu0 %v1009
    %1048 = vmatprep.subr.bf16.mxu0 0
    %1049 = vmatpush1.bf16.msra.mxu0 %v1008
    %1050 = vmatprep.subr.bf16.mxu0 0
    %1051 = vmatpush2.bf16.msra.mxu0 0
    %1052 = vmatprep.subr.bf16.mxu0 0
    %1053 = vmatpush2.bf16.msra.mxu0 0
    %1054 = vmatprep.subr.bf16.mxu0 0
    %1055 = vmatpush2.bf16.msra.mxu0 0
    %1056 = vmatprep.subr.bf16.mxu0 0
    %1057 = vmatpush2.bf16.msra.mxu0 0
    %1058 = vmatprep.subr.bf16.mxu0 0
    %1059 = vmatpush2.bf16.msra.mxu0 0
    %1060 = vmatprep.subr.bf16.mxu0 0
    %1061 = vmatpush2.bf16.msra.mxu0 0
    %1062 = vmatprep.subr.bf16.mxu0 0
    %1063 = vmatpush2.bf16.msra.mxu0 0
    %1064 = vmatprep.subr.bf16.mxu0 0
    %1065 = vmatpush2.bf16.msra.mxu0 0
    %1066 = vmatprep.mubr.bf16.mxu0 0
    %1067 = vmatmul.mubr.bf16.gmra.mxu0 %v1017
    %v1068 = vpop.f32.mrf.mxu0
    %v1069 = vadd.f32 0.0, %v1068
    %v1070 = vpop.f32.mrf.mxu0
    %v1071 = vpop.f32.mrf.mxu0
    %v1072 = vadd.f32 0.0, %v1071
    %v1073 = vpop.f32.mrf.mxu0
    %1074 = vmatprep.mubr.bf16.mxu0 0
    %1075 = vmatmul.mubr.bf16.gmra.mxu0 %v1020
    %v1076 = vpop.f32.mrf.mxu0
    %v1077 = vadd.f32 0.0, %v1076
    %v1078 = vpop.f32.mrf.mxu0
    %v1079 = vpop.f32.mrf.mxu0
    %v1080 = vadd.f32 0.0, %v1079
    %v1081 = vpop.f32.mrf.mxu0
    %1082 = vmatprep.mubr.bf16.mxu0 0
    %1083 = vmatmul.mubr.bf16.gmra.mxu0 %v1023
    %v1084 = vpop.f32.mrf.mxu0
    %v1085 = vadd.f32 0.0, %v1084
    %v1086 = vpop.f32.mrf.mxu0
    %v1087 = vpop.f32.mrf.mxu0
    %v1088 = vadd.f32 0.0, %v1087
    %v1089 = vpop.f32.mrf.mxu0
    %1090 = vmatprep.mubr.bf16.mxu0 0
    %1091 = vmatmul.mubr.bf16.gmra.mxu0 %v1026
    %v1092 = vpop.f32.mrf.mxu0
    %v1093 = vadd.f32 0.0, %v1092
    %v1094 = vpop.f32.mrf.mxu0
    %v1095 = vpop.f32.mrf.mxu0
    %v1096 = vadd.f32 0.0, %v1095
    %v1097 = vpop.f32.mrf.mxu0
    %1098 = vmatprep.mubr.bf16.mxu0 0
    %1099 = vmatmul.mubr.bf16.gmra.mxu0 %v1029
    %v1100 = vpop.f32.mrf.mxu0
    %v1101 = vadd.f32 0.0, %v1100
    %v1102 = vpop.f32.mrf.mxu0
    %v1103 = vpop.f32.mrf.mxu0
    %v1104 = vadd.f32 0.0, %v1103
    %v1105 = vpop.f32.mrf.mxu0
    %1106 = vmatprep.mubr.bf16.mxu0 0
    %1107 = vmatmul.mubr.bf16.gmra.mxu0 %v1032
    %v1108 = vpop.f32.mrf.mxu0
    %v1109 = vadd.f32 0.0, %v1108
    %v1110 = vpop.f32.mrf.mxu0
    %v1111 = vpop.f32.mrf.mxu0
    %v1112 = vadd.f32 0.0, %v1111
    %v1113 = vpop.f32.mrf.mxu0
    %1114 = vdwg.mxu0
    %v1115 = vadd.f32 %v953, %v1069
    %v1116 = vadd.f32 %v954, %v1072
    %v1117 = vadd.f32 %v955, %v1077
    %v1118 = vadd.f32 %v956, %v1080
    %v1119 = vadd.f32 %v957, %v1085
    %v1120 = vadd.f32 %v958, %v1088
    %v1121 = vadd.f32 %v959, %v1093
    %v1122 = vadd.f32 %v960, %v1096
    %v1123 = vadd.f32 %v961, %v1101
    %v1124 = vadd.f32 %v962, %v1104
    %v1125 = vadd.f32 %v963, %v1109
    %v1126 = vadd.f32 %v964, %v1112
    %v1127 = vld [vmem:[%s1 + $0xc] sm:$0xf]
    %v1128 = vld [vmem:[%s1 + $0x10] sm:$0xf]
    %v1129 = vld [vmem:[%s1 + $0x14] sm:$0xf]
    %v1130 = vld [vmem:[%s1 + $0x18] sm:$0xf]
    %v1131 = vld [vmem:[%s1 + $0x1c] sm:$0xf]
    %v1132 = vld [vmem:[%s1 + $0x20] sm:$0xf]
    %v1133 = vld [vmem:[%s1 + $0x24] sm:$0xf]
    %v1134 = vld [vmem:[%s1 + $0x28] sm:$0xf]
    %v1135 = vld [vmem:[%s1 + $0x2c] sm:$0xf]
    %v1136 = vld [vmem:[%s1 + $0x30] sm:$0xf]
    %v1137 = vld [vmem:[%s1 + $0x34] sm:$0xf]
    %v1138 = vld [vmem:[%s1 + $0x38] sm:$0xf]
    %s1139 = scalar_lea.vmem [#allocation3], 192
    %v1140 = vld [vmem:[%s1139] sm:$0xf]
    %v1141 = vld [vmem:[%s1139 + $0x4] sm:$0xf]
    %v1142 = vld [vmem:[%s1139 + $0x8] sm:$0xf]
    %v1143 = vld [vmem:[%s1139 + $0xc] sm:$0xf]
    %v1144 = vld [vmem:[%s1139 + $0x10] sm:$0xf]
    %v1145 = vld [vmem:[%s1139 + $0x14] sm:$0xf]
    %v1146 = vld [vmem:[%s1139 + $0x18] sm:$0xf]
    %v1147 = vld [vmem:[%s1139 + $0x1c] sm:$0xf]
    %v1160 = vunpack.c.l.b16 %v1127
    %v1161 = vunpack.c.l.b16 %v1128
    %v1162 = vunpack.c.l.b16 %v1129
    %v1163 = vunpack.c.l.b16 %v1130
    %v1164 = vunpack.c.l.b16 %v1131
    %v1165 = vunpack.c.l.b16 %v1132
    %v1166 = vunpack.c.l.b16 %v1133
    %v1167 = vunpack.c.l.b16 %v1134
    %v1168 = vunpack.c.l.b16 %v1135
    %v1169 = vunpack.c.l.b16 %v1136
    %v1170 = vunpack.c.l.b16 %v1137
    %v1171 = vunpack.c.l.b16 %v1138
    %v1172 = vpack.c.b16 %v1161, %v1160
    %v1173 = vpack.c.b16 %v1163, %v1162
    %v1174 = vpack.c.b16 %v1165, %v1164
    %v1175 = vpack.c.b16 %v1167, %v1166
    %v1176 = vpack.c.b16 %v1169, %v1168
    %v1177 = vpack.c.b16 %v1171, %v1170
    %v1186 = vunpack.c.l.b16 %v1140
    %v1187 = vunpack.c.l.b16 %v1141
    %v1188 = vunpack.c.l.b16 %v1142
    %v1189 = vunpack.c.l.b16 %v1143
    %v1190 = vunpack.c.l.b16 %v1144
    %v1191 = vunpack.c.l.b16 %v1145
    %v1192 = vunpack.c.l.b16 %v1146
    %v1193 = vunpack.c.l.b16 %v1147
    %v1194 = vpack.c.b16 %v1187, %v1186
    %v1195 = vpack.c.b16 %v1189, %v1188
    %v1196 = vpack.c.b16 %v1191, %v1190
    %v1197 = vpack.c.b16 %v1193, %v1192
    %v1203 = vsel %vm171, %v1172, 0
    %v1206 = vsel %vm171, %v1173, 0
    %v1209 = vsel %vm171, %v1174, 0
    %v1212 = vsel %vm171, %v1175, 0
    %v1215 = vsel %vm171, %v1176, 0
    %v1218 = vsel %vm171, %v1177, 0
    %1220 = vmatprep.subr.bf16.mxu0 0
    %1221 = vmatpush1.bf16.msra.mxu0 0
    %1222 = vmatprep.subr.bf16.mxu0 0
    %1223 = vmatpush1.bf16.msra.mxu0 0
    %1224 = vmatprep.subr.bf16.mxu0 0
    %1225 = vmatpush1.bf16.msra.mxu0 0
    %1226 = vmatprep.subr.bf16.mxu0 0
    %1227 = vmatpush1.bf16.msra.mxu0 0
    %1228 = vmatprep.subr.bf16.mxu0 0
    %1229 = vmatpush1.bf16.msra.mxu0 %v1197
    %1230 = vmatprep.subr.bf16.mxu0 0
    %1231 = vmatpush1.bf16.msra.mxu0 %v1196
    %1232 = vmatprep.subr.bf16.mxu0 0
    %1233 = vmatpush1.bf16.msra.mxu0 %v1195
    %1234 = vmatprep.subr.bf16.mxu0 0
    %1235 = vmatpush1.bf16.msra.mxu0 %v1194
    %1236 = vmatprep.subr.bf16.mxu0 0
    %1237 = vmatpush2.bf16.msra.mxu0 0
    %1238 = vmatprep.subr.bf16.mxu0 0
    %1239 = vmatpush2.bf16.msra.mxu0 0
    %1240 = vmatprep.subr.bf16.mxu0 0
    %1241 = vmatpush2.bf16.msra.mxu0 0
    %1242 = vmatprep.subr.bf16.mxu0 0
    %1243 = vmatpush2.bf16.msra.mxu0 0
    %1244 = vmatprep.subr.bf16.mxu0 0
    %1245 = vmatpush2.bf16.msra.mxu0 0
    %1246 = vmatprep.subr.bf16.mxu0 0
    %1247 = vmatpush2.bf16.msra.mxu0 0
    %1248 = vmatprep.subr.bf16.mxu0 0
    %1249 = vmatpush2.bf16.msra.mxu0 0
    %1250 = vmatprep.subr.bf16.mxu0 0
    %1251 = vmatpush2.bf16.msra.mxu0 0
    %1252 = vmatprep.mubr.bf16.mxu0 0
    %1253 = vmatmul.mubr.bf16.gmra.mxu0 %v1203
    %v1254 = vpop.f32.mrf.mxu0
    %v1255 = vadd.f32 0.0, %v1254
    %v1256 = vpop.f32.mrf.mxu0
    %v1257 = vpop.f32.mrf.mxu0
    %v1258 = vadd.f32 0.0, %v1257
    %v1259 = vpop.f32.mrf.mxu0
    %1260 = vmatprep.mubr.bf16.mxu0 0
    %1261 = vmatmul.mubr.bf16.gmra.mxu0 %v1206
    %v1262 = vpop.f32.mrf.mxu0
    %v1263 = vadd.f32 0.0, %v1262
    %v1264 = vpop.f32.mrf.mxu0
    %v1265 = vpop.f32.mrf.mxu0
    %v1266 = vadd.f32 0.0, %v1265
    %v1267 = vpop.f32.mrf.mxu0
    %1268 = vmatprep.mubr.bf16.mxu0 0
    %1269 = vmatmul.mubr.bf16.gmra.mxu0 %v1209
    %v1270 = vpop.f32.mrf.mxu0
    %v1271 = vadd.f32 0.0, %v1270
    %v1272 = vpop.f32.mrf.mxu0
    %v1273 = vpop.f32.mrf.mxu0
    %v1274 = vadd.f32 0.0, %v1273
    %v1275 = vpop.f32.mrf.mxu0
    %1276 = vmatprep.mubr.bf16.mxu0 0
    %1277 = vmatmul.mubr.bf16.gmra.mxu0 %v1212
    %v1278 = vpop.f32.mrf.mxu0
    %v1279 = vadd.f32 0.0, %v1278
    %v1280 = vpop.f32.mrf.mxu0
    %v1281 = vpop.f32.mrf.mxu0
    %v1282 = vadd.f32 0.0, %v1281
    %v1283 = vpop.f32.mrf.mxu0
    %1284 = vmatprep.mubr.bf16.mxu0 0
    %1285 = vmatmul.mubr.bf16.gmra.mxu0 %v1215
    %v1286 = vpop.f32.mrf.mxu0
    %v1287 = vadd.f32 0.0, %v1286
    %v1288 = vpop.f32.mrf.mxu0
    %v1289 = vpop.f32.mrf.mxu0
    %v1290 = vadd.f32 0.0, %v1289
    %v1291 = vpop.f32.mrf.mxu0
    %1292 = vmatprep.mubr.bf16.mxu0 0
    %1293 = vmatmul.mubr.bf16.gmra.mxu0 %v1218
    %v1294 = vpop.f32.mrf.mxu0
    %v1295 = vadd.f32 0.0, %v1294
    %v1296 = vpop.f32.mrf.mxu0
    %v1297 = vpop.f32.mrf.mxu0
    %v1298 = vadd.f32 0.0, %v1297
    %v1299 = vpop.f32.mrf.mxu0
    %1300 = vdwg.mxu0
    %v1301 = vadd.f32 %v1115, %v1255
    %v1302 = vadd.f32 %v1116, %v1258
    %v1303 = vadd.f32 %v1117, %v1263
    %v1304 = vadd.f32 %v1118, %v1266
    %v1305 = vadd.f32 %v1119, %v1271
    %v1306 = vadd.f32 %v1120, %v1274
    %v1307 = vadd.f32 %v1121, %v1279
    %v1308 = vadd.f32 %v1122, %v1282
    %v1309 = vadd.f32 %v1123, %v1287
    %v1310 = vadd.f32 %v1124, %v1290
    %v1311 = vadd.f32 %v1125, %v1295
    %v1312 = vadd.f32 %v1126, %v1298
    %v1313 = vld [vmem:[%s1 + $0xc] sm:$0xf]
    %v1314 = vld [vmem:[%s1 + $0x10] sm:$0xf]
    %v1315 = vld [vmem:[%s1 + $0x14] sm:$0xf]
    %v1316 = vld [vmem:[%s1 + $0x18] sm:$0xf]
    %v1317 = vld [vmem:[%s1 + $0x1c] sm:$0xf]
    %v1318 = vld [vmem:[%s1 + $0x20] sm:$0xf]
    %v1319 = vld [vmem:[%s1 + $0x24] sm:$0xf]
    %v1320 = vld [vmem:[%s1 + $0x28] sm:$0xf]
    %v1321 = vld [vmem:[%s1 + $0x2c] sm:$0xf]
    %v1322 = vld [vmem:[%s1 + $0x30] sm:$0xf]
    %v1323 = vld [vmem:[%s1 + $0x34] sm:$0xf]
    %v1324 = vld [vmem:[%s1 + $0x38] sm:$0xf]
    %v1325 = vld [vmem:[%s1 + $0x3c] sm:$0x1]
    %s1326 = scalar_lea.vmem [#allocation3], 224
    %v1327 = vld [vmem:[%s1326] sm:$0xf]
    %v1328 = vld [vmem:[%s1326 + $0x4] sm:$0xf]
    %v1329 = vld [vmem:[%s1326 + $0x8] sm:$0xf]
    %v1330 = vld [vmem:[%s1326 + $0xc] sm:$0xf]
    %v1331 = vld [vmem:[%s1326 + $0x10] sm:$0xf]
    %v1332 = vld [vmem:[%s1326 + $0x14] sm:$0xf]
    %v1333 = vld [vmem:[%s1326 + $0x18] sm:$0xf]
    %v1334 = vld [vmem:[%s1326 + $0x1c] sm:$0xf]
    %v1348 = vunpack.c.l.b16 %v1313
    %v1349 = vunpack.c.l.b16 %v1314
    %v1350 = vunpack.c.l.b16 %v1315
    %v1351 = vunpack.c.l.b16 %v1316
    %v1352 = vunpack.c.l.b16 %v1317
    %v1353 = vunpack.c.l.b16 %v1318
    %v1354 = vunpack.c.l.b16 %v1319
    %v1355 = vunpack.c.l.b16 %v1320
    %v1356 = vunpack.c.l.b16 %v1321
    %v1357 = vunpack.c.l.b16 %v1322
    %v1358 = vunpack.c.l.b16 %v1323
    %v1359 = vunpack.c.l.b16 %v1324
    %v1360 = vunpack.c.l.b16 %v1325
    %v1361 = vpack.c.b16 %v1349, %v1348
    %v1362 = vpack.c.b16 %v1351, %v1350
    %v1363 = vpack.c.b16 %v1353, %v1352
    %v1364 = vpack.c.b16 %v1355, %v1354
    %v1365 = vpack.c.b16 %v1357, %v1356
    %v1366 = vpack.c.b16 %v1359, %v1358
    %v1367 = vpack.c.b16 %v1360, %v1360
    %v1369 = vshrl.u32 %v1361, 16
    %v1371 = vshll.u32 %v1361, 16
    %v1373 = vrot.slane %v1371, 1
    %v1374 = vor.u32 %v1369, %v1373
    %v1376 = vshll.u32 %v1362, 16
    %v1378 = vrot.slane %v1376, 1
    %v1379 = vsel %vm94, %v1374, %v1378
    %v1380 = vshrl.u32 %v1362, 16
    %v1382 = vor.u32 %v1380, %v1378
    %v1384 = vshll.u32 %v1363, 16
    %v1386 = vrot.slane %v1384, 1
    %v1387 = vsel %vm94, %v1382, %v1386
    %v1388 = vshrl.u32 %v1363, 16
    %v1390 = vor.u32 %v1388, %v1386
    %v1392 = vshll.u32 %v1364, 16
    %v1394 = vrot.slane %v1392, 1
    %v1395 = vsel %vm94, %v1390, %v1394
    %v1396 = vshrl.u32 %v1364, 16
    %v1398 = vor.u32 %v1396, %v1394
    %v1400 = vshll.u32 %v1365, 16
    %v1402 = vrot.slane %v1400, 1
    %v1403 = vsel %vm94, %v1398, %v1402
    %v1404 = vshrl.u32 %v1365, 16
    %v1406 = vor.u32 %v1404, %v1402
    %v1408 = vshll.u32 %v1366, 16
    %v1410 = vrot.slane %v1408, 1
    %v1411 = vsel %vm94, %v1406, %v1410
    %v1412 = vshrl.u32 %v1366, 16
    %v1414 = vor.u32 %v1412, %v1410
    %v1416 = vshll.u32 %v1367, 16
    %v1418 = vrot.slane %v1416, 1
    %v1419 = vsel %vm94, %v1414, %v1418
    %v1428 = vunpack.c.l.b16 %v1327
    %v1429 = vunpack.c.l.b16 %v1328
    %v1430 = vunpack.c.l.b16 %v1329
    %v1431 = vunpack.c.l.b16 %v1330
    %v1432 = vunpack.c.l.b16 %v1331
    %v1433 = vunpack.c.l.b16 %v1332
    %v1434 = vunpack.c.l.b16 %v1333
    %v1435 = vunpack.c.l.b16 %v1334
    %v1436 = vpack.c.b16 %v1429, %v1428
    %v1437 = vpack.c.b16 %v1431, %v1430
    %v1438 = vpack.c.b16 %v1433, %v1432
    %v1439 = vpack.c.b16 %v1435, %v1434
    %v1445 = vsel %vm171, %v1379, 0
    %v1448 = vsel %vm171, %v1387, 0
    %v1451 = vsel %vm171, %v1395, 0
    %v1454 = vsel %vm171, %v1403, 0
    %v1457 = vsel %vm171, %v1411, 0
    %v1460 = vsel %vm171, %v1419, 0
    %1462 = vmatprep.subr.bf16.mxu0 0
    %1463 = vmatpush1.bf16.msra.mxu0 0
    %1464 = vmatprep.subr.bf16.mxu0 0
    %1465 = vmatpush1.bf16.msra.mxu0 0
    %1466 = vmatprep.subr.bf16.mxu0 0
    %1467 = vmatpush1.bf16.msra.mxu0 0
    %1468 = vmatprep.subr.bf16.mxu0 0
    %1469 = vmatpush1.bf16.msra.mxu0 0
    %1470 = vmatprep.subr.bf16.mxu0 0
    %1471 = vmatpush1.bf16.msra.mxu0 %v1439
    %1472 = vmatprep.subr.bf16.mxu0 0
    %1473 = vmatpush1.bf16.msra.mxu0 %v1438
    %1474 = vmatprep.subr.bf16.mxu0 0
    %1475 = vmatpush1.bf16.msra.mxu0 %v1437
    %1476 = vmatprep.subr.bf16.mxu0 0
    %1477 = vmatpush1.bf16.msra.mxu0 %v1436
    %1478 = vmatprep.subr.bf16.mxu0 0
    %1479 = vmatpush2.bf16.msra.mxu0 0
    %1480 = vmatprep.subr.bf16.mxu0 0
    %1481 = vmatpush2.bf16.msra.mxu0 0
    %1482 = vmatprep.subr.bf16.mxu0 0
    %1483 = vmatpush2.bf16.msra.mxu0 0
    %1484 = vmatprep.subr.bf16.mxu0 0
    %1485 = vmatpush2.bf16.msra.mxu0 0
    %1486 = vmatprep.subr.bf16.mxu0 0
    %1487 = vmatpush2.bf16.msra.mxu0 0
    %1488 = vmatprep.subr.bf16.mxu0 0
    %1489 = vmatpush2.bf16.msra.mxu0 0
    %1490 = vmatprep.subr.bf16.mxu0 0
    %1491 = vmatpush2.bf16.msra.mxu0 0
    %1492 = vmatprep.subr.bf16.mxu0 0
    %1493 = vmatpush2.bf16.msra.mxu0 0
    %1494 = vmatprep.mubr.bf16.mxu0 0
    %1495 = vmatmul.mubr.bf16.gmra.mxu0 %v1445
    %v1496 = vpop.f32.mrf.mxu0
    %v1497 = vadd.f32 0.0, %v1496
    %v1498 = vpop.f32.mrf.mxu0
    %v1499 = vpop.f32.mrf.mxu0
    %v1500 = vadd.f32 0.0, %v1499
    %v1501 = vpop.f32.mrf.mxu0
    %1502 = vmatprep.mubr.bf16.mxu0 0
    %1503 = vmatmul.mubr.bf16.gmra.mxu0 %v1448
    %v1504 = vpop.f32.mrf.mxu0
    %v1505 = vadd.f32 0.0, %v1504
    %v1506 = vpop.f32.mrf.mxu0
    %v1507 = vpop.f32.mrf.mxu0
    %v1508 = vadd.f32 0.0, %v1507
    %v1509 = vpop.f32.mrf.mxu0
    %1510 = vmatprep.mubr.bf16.mxu0 0
    %1511 = vmatmul.mubr.bf16.gmra.mxu0 %v1451
    %v1512 = vpop.f32.mrf.mxu0
    %v1513 = vadd.f32 0.0, %v1512
    %v1514 = vpop.f32.mrf.mxu0
    %v1515 = vpop.f32.mrf.mxu0
    %v1516 = vadd.f32 0.0, %v1515
    %v1517 = vpop.f32.mrf.mxu0
    %1518 = vmatprep.mubr.bf16.mxu0 0
    %1519 = vmatmul.mubr.bf16.gmra.mxu0 %v1454
    %v1520 = vpop.f32.mrf.mxu0
    %v1521 = vadd.f32 0.0, %v1520
    %v1522 = vpop.f32.mrf.mxu0
    %v1523 = vpop.f32.mrf.mxu0
    %v1524 = vadd.f32 0.0, %v1523
    %v1525 = vpop.f32.mrf.mxu0
    %1526 = vmatprep.mubr.bf16.mxu0 0
    %1527 = vmatmul.mubr.bf16.gmra.mxu0 %v1457
    %v1528 = vpop.f32.mrf.mxu0
    %v1529 = vadd.f32 0.0, %v1528
    %v1530 = vpop.f32.mrf.mxu0
    %v1531 = vpop.f32.mrf.mxu0
    %v1532 = vadd.f32 0.0, %v1531
    %v1533 = vpop.f32.mrf.mxu0
    %1534 = vmatprep.mubr.bf16.mxu0 0
    %1535 = vmatmul.mubr.bf16.gmra.mxu0 %v1460
    %v1536 = vpop.f32.mrf.mxu0
    %v1537 = vadd.f32 0.0, %v1536
    %v1538 = vpop.f32.mrf.mxu0
    %v1539 = vpop.f32.mrf.mxu0
    %v1540 = vadd.f32 0.0, %v1539
    %v1541 = vpop.f32.mrf.mxu0
    %1542 = vdwg.mxu0
    %v1543 = vadd.f32 %v1301, %v1497
    %v1544 = vadd.f32 %v1302, %v1500
    %v1545 = vadd.f32 %v1303, %v1505
    %v1546 = vadd.f32 %v1304, %v1508
    %v1547 = vadd.f32 %v1305, %v1513
    %v1548 = vadd.f32 %v1306, %v1516
    %v1549 = vadd.f32 %v1307, %v1521
    %v1550 = vadd.f32 %v1308, %v1524
    %v1551 = vadd.f32 %v1309, %v1529
    %v1552 = vadd.f32 %v1310, %v1532
    %v1553 = vadd.f32 %v1311, %v1537
    %v1554 = vadd.f32 %v1312, %v1540
    %v1555 = vld [vmem:[%s1 + $0xc] sm:$0xe]
    %s1556 = scalar_lea.vmem [#allocation3], 256
    %v1557 = vld [vmem:[%s1556] sm:$0xf]
    %v1558 = vld [vmem:[%s1556 + $0x4] sm:$0xf]
    %v1559 = vld [vmem:[%s1556 + $0x8] sm:$0xf]
    %v1560 = vld [vmem:[%s1556 + $0xc] sm:$0xf]
    %v1561 = vld [vmem:[%s1556 + $0x10] sm:$0xf]
    %v1562 = vld [vmem:[%s1556 + $0x14] sm:$0xf]
    %v1563 = vld [vmem:[%s1556 + $0x18] sm:$0xf]
    %v1564 = vld [vmem:[%s1556 + $0x1c] sm:$0xf]
    %v1566 = vunpack.c.l.b16 %v1555
    %v1567 = vpack.c.b16 %v1349, %v1566
    %v1568 = vrot.slane %v1567, 1
    %v1569 = vrot.slane %v1362, 1
    %v1570 = vsel %vm401, %v1568, %v1569
    %v1571 = vrot.slane %v1363, 1
    %v1572 = vsel %vm401, %v1569, %v1571
    %v1573 = vrot.slane %v1364, 1
    %v1574 = vsel %vm401, %v1571, %v1573
    %v1575 = vrot.slane %v1365, 1
    %v1576 = vsel %vm401, %v1573, %v1575
    %v1577 = vrot.slane %v1366, 1
    %v1578 = vsel %vm401, %v1575, %v1577
    %v1579 = vrot.slane %v1367, 1
    %v1580 = vsel %vm401, %v1577, %v1579
    %v1589 = vunpack.c.l.b16 %v1557
    %v1590 = vunpack.c.l.b16 %v1558
    %v1591 = vunpack.c.l.b16 %v1559
    %v1592 = vunpack.c.l.b16 %v1560
    %v1593 = vunpack.c.l.b16 %v1561
    %v1594 = vunpack.c.l.b16 %v1562
    %v1595 = vunpack.c.l.b16 %v1563
    %v1596 = vunpack.c.l.b16 %v1564
    %v1597 = vpack.c.b16 %v1590, %v1589
    %v1598 = vpack.c.b16 %v1592, %v1591
    %v1599 = vpack.c.b16 %v1594, %v1593
    %v1600 = vpack.c.b16 %v1596, %v1595
    %v1606 = vsel %vm171, %v1570, 0
    %v1609 = vsel %vm171, %v1572, 0
    %v1612 = vsel %vm171, %v1574, 0
    %v1615 = vsel %vm171, %v1576, 0
    %v1618 = vsel %vm171, %v1578, 0
    %v1621 = vsel %vm171, %v1580, 0
    %1623 = vmatprep.subr.bf16.mxu0 0
    %1624 = vmatpush1.bf16.msra.mxu0 0
    %1625 = vmatprep.subr.bf16.mxu0 0
    %1626 = vmatpush1.bf16.msra.mxu0 0
    %1627 = vmatprep.subr.bf16.mxu0 0
    %1628 = vmatpush1.bf16.msra.mxu0 0
    %1629 = vmatprep.subr.bf16.mxu0 0
    %1630 = vmatpush1.bf16.msra.mxu0 0
    %1631 = vmatprep.subr.bf16.mxu0 0
    %1632 = vmatpush1.bf16.msra.mxu0 %v1600
    %1633 = vmatprep.subr.bf16.mxu0 0
    %1634 = vmatpush1.bf16.msra.mxu0 %v1599
    %1635 = vmatprep.subr.bf16.mxu0 0
    %1636 = vmatpush1.bf16.msra.mxu0 %v1598
    %1637 = vmatprep.subr.bf16.mxu0 0
    %1638 = vmatpush1.bf16.msra.mxu0 %v1597
    %1639 = vmatprep.subr.bf16.mxu0 0
    %1640 = vmatpush2.bf16.msra.mxu0 0
    %1641 = vmatprep.subr.bf16.mxu0 0
    %1642 = vmatpush2.bf16.msra.mxu0 0
    %1643 = vmatprep.subr.bf16.mxu0 0
    %1644 = vmatpush2.bf16.msra.mxu0 0
    %1645 = vmatprep.subr.bf16.mxu0 0
    %1646 = vmatpush2.bf16.msra.mxu0 0
    %1647 = vmatprep.subr.bf16.mxu0 0
    %1648 = vmatpush2.bf16.msra.mxu0 0
    %1649 = vmatprep.subr.bf16.mxu0 0
    %1650 = vmatpush2.bf16.msra.mxu0 0
    %1651 = vmatprep.subr.bf16.mxu0 0
    %1652 = vmatpush2.bf16.msra.mxu0 0
    %1653 = vmatprep.subr.bf16.mxu0 0
    %1654 = vmatpush2.bf16.msra.mxu0 0
    %1655 = vmatprep.mubr.bf16.mxu0 0
    %1656 = vmatmul.mubr.bf16.gmra.mxu0 %v1606
    %v1657 = vpop.f32.mrf.mxu0
    %v1658 = vadd.f32 0.0, %v1657
    %v1659 = vpop.f32.mrf.mxu0
    %v1660 = vpop.f32.mrf.mxu0
    %v1661 = vadd.f32 0.0, %v1660
    %v1662 = vpop.f32.mrf.mxu0
    %1663 = vmatprep.mubr.bf16.mxu0 0
    %1664 = vmatmul.mubr.bf16.gmra.mxu0 %v1609
    %v1665 = vpop.f32.mrf.mxu0
    %v1666 = vadd.f32 0.0, %v1665
    %v1667 = vpop.f32.mrf.mxu0
    %v1668 = vpop.f32.mrf.mxu0
    %v1669 = vadd.f32 0.0, %v1668
    %v1670 = vpop.f32.mrf.mxu0
    %1671 = vmatprep.mubr.bf16.mxu0 0
    %1672 = vmatmul.mubr.bf16.gmra.mxu0 %v1612
    %v1673 = vpop.f32.mrf.mxu0
    %v1674 = vadd.f32 0.0, %v1673
    %v1675 = vpop.f32.mrf.mxu0
    %v1676 = vpop.f32.mrf.mxu0
    %v1677 = vadd.f32 0.0, %v1676
    %v1678 = vpop.f32.mrf.mxu0
    %1679 = vmatprep.mubr.bf16.mxu0 0
    %1680 = vmatmul.mubr.bf16.gmra.mxu0 %v1615
    %v1681 = vpop.f32.mrf.mxu0
    %v1682 = vadd.f32 0.0, %v1681
    %v1683 = vpop.f32.mrf.mxu0
    %v1684 = vpop.f32.mrf.mxu0
    %v1685 = vadd.f32 0.0, %v1684
    %v1686 = vpop.f32.mrf.mxu0
    %1687 = vmatprep.mubr.bf16.mxu0 0
    %1688 = vmatmul.mubr.bf16.gmra.mxu0 %v1618
    %v1689 = vpop.f32.mrf.mxu0
    %v1690 = vadd.f32 0.0, %v1689
    %v1691 = vpop.f32.mrf.mxu0
    %v1692 = vpop.f32.mrf.mxu0
    %v1693 = vadd.f32 0.0, %v1692
    %v1694 = vpop.f32.mrf.mxu0
    %1695 = vmatprep.mubr.bf16.mxu0 0
    %1696 = vmatmul.mubr.bf16.gmra.mxu0 %v1621
    %v1697 = vpop.f32.mrf.mxu0
    %v1698 = vadd.f32 0.0, %v1697
    %v1699 = vpop.f32.mrf.mxu0
    %v1700 = vpop.f32.mrf.mxu0
    %v1701 = vadd.f32 0.0, %v1700
    %v1702 = vpop.f32.mrf.mxu0
    %1703 = vdwg.mxu0
    %v1704 = vadd.f32 %v1543, %v1658
    %v1705 = vadd.f32 %v1544, %v1661
    %v1706 = vadd.f32 %v1545, %v1666
    %v1707 = vadd.f32 %v1546, %v1669
    %v1708 = vadd.f32 %v1547, %v1674
    %v1709 = vadd.f32 %v1548, %v1677
    %v1710 = vadd.f32 %v1549, %v1682
    %v1711 = vadd.f32 %v1550, %v1685
    %v1712 = vadd.f32 %v1551, %v1690
    %v1713 = vadd.f32 %v1552, %v1693
    %v1714 = vadd.f32 %v1553, %v1698
    %v1715 = vadd.f32 %v1554, %v1701
    %s1716 = sld [smem:[#allocation2]]
    %vm1717 = vcmp.ge.f32.partialorder %v1704, 0.0
    %vm1718 = vcmp.ge.f32.partialorder %v1705, 0.0
    %vm1719 = vcmp.ge.f32.partialorder %v1706, 0.0
    %vm1720 = vcmp.ge.f32.partialorder %v1707, 0.0
    %vm1721 = vcmp.ge.f32.partialorder %v1708, 0.0
    %vm1722 = vcmp.ge.f32.partialorder %v1709, 0.0
    %vm1723 = vcmp.ge.f32.partialorder %v1710, 0.0
    %vm1724 = vcmp.ge.f32.partialorder %v1711, 0.0
    %vm1725 = vcmp.ge.f32.partialorder %v1712, 0.0
    %vm1726 = vcmp.ge.f32.partialorder %v1713, 0.0
    %vm1727 = vcmp.ge.f32.partialorder %v1714, 0.0
    %vm1728 = vcmp.ge.f32.partialorder %v1715, 0.0
    %v1729 = vstv %s1716
    %v1730 = vmul.f32 %v1729, %v1704
    %v1731 = vmul.f32 %v1729, %v1705
    %v1732 = vmul.f32 %v1729, %v1706
    %v1733 = vmul.f32 %v1729, %v1707
    %v1734 = vmul.f32 %v1729, %v1708
    %v1735 = vmul.f32 %v1729, %v1709
    %v1736 = vmul.f32 %v1729, %v1710
    %v1737 = vmul.f32 %v1729, %v1711
    %v1738 = vmul.f32 %v1729, %v1712
    %v1739 = vmul.f32 %v1729, %v1713
    %v1740 = vmul.f32 %v1729, %v1714
    %v1741 = vmul.f32 %v1729, %v1715
    %v1742 = vsel %vm1717, %v1704, %v1730
    %v1743 = vsel %vm1718, %v1705, %v1731
    %v1744 = vsel %vm1719, %v1706, %v1732
    %v1745 = vsel %vm1720, %v1707, %v1733
    %v1746 = vsel %vm1721, %v1708, %v1734
    %v1747 = vsel %vm1722, %v1709, %v1735
    %v1748 = vsel %vm1723, %v1710, %v1736
    %v1749 = vsel %vm1724, %v1711, %v1737
    %v1750 = vsel %vm1725, %v1712, %v1738
    %v1751 = vsel %vm1726, %v1713, %v1739
    %v1752 = vsel %vm1727, %v1714, %v1740
    %v1753 = vsel %vm1728, %v1715, %v1741
    %v1754 = vpack.c.bf16 %v1743, %v1742
    %v1755 = vpack.c.bf16 %v1745, %v1744
    %v1756 = vpack.c.bf16 %v1747, %v1746
    %v1757 = vpack.c.bf16 %v1749, %v1748
    %v1758 = vpack.c.bf16 %v1751, %v1750
    %v1759 = vpack.c.bf16 %v1753, %v1752
    %v1766 = vunpack.c.l.b16 %v1754
    %v1767 = vunpack.c.h.b16 %v1754
    %v1768 = vunpack.c.l.b16 %v1755
    %v1769 = vunpack.c.h.b16 %v1755
    %v1770 = vunpack.c.l.b16 %v1756
    %v1771 = vunpack.c.h.b16 %v1756
    %v1772 = vunpack.c.l.b16 %v1757
    %v1773 = vunpack.c.h.b16 %v1757
    %v1774 = vunpack.c.l.b16 %v1758
    %v1775 = vunpack.c.h.b16 %v1758
    %v1776 = vunpack.c.l.b16 %v1759
    %v1777 = vunpack.c.h.b16 %v1759
    %v1778 = vpack.c.b16 %v1766, %v1766
    %v1779 = vpack.c.b16 %v1767, %v1767
    %v1780 = vpack.c.b16 %v1768, %v1768
    %v1781 = vpack.c.b16 %v1769, %v1769
    %v1782 = vpack.c.b16 %v1770, %v1770
    %v1783 = vpack.c.b16 %v1771, %v1771
    %v1784 = vpack.c.b16 %v1772, %v1772
    %v1785 = vpack.c.b16 %v1773, %v1773
    %v1786 = vpack.c.b16 %v1774, %v1774
    %v1787 = vpack.c.b16 %v1775, %v1775
    %v1788 = vpack.c.b16 %v1776, %v1776
    %v1789 = vpack.c.b16 %v1777, %v1777
    %1802 = vst [vmem:[#allocation6] sm:$0xf] %v1778
    %1803 = vst [vmem:[#allocation6 + $0x4] sm:$0xf] %v1779
    %1804 = vst [vmem:[#allocation6 + $0x8] sm:$0xf] %v1780
    %1805 = vst [vmem:[#allocation6 + $0xc] sm:$0xf] %v1781
    %1806 = vst [vmem:[#allocation6 + $0x10] sm:$0xf] %v1782
    %1807 = vst [vmem:[#allocation6 + $0x14] sm:$0xf] %v1783
    %1808 = vst [vmem:[#allocation6 + $0x18] sm:$0xf] %v1784
    %1809 = vst [vmem:[#allocation6 + $0x1c] sm:$0xf] %v1785
    %1810 = vst [vmem:[#allocation6 + $0x20] sm:$0xf] %v1786
    %1811 = vst [vmem:[#allocation6 + $0x24] sm:$0xf] %v1787
    %1812 = vst [vmem:[#allocation6 + $0x28] sm:$0xf] %v1788
    %1813 = vst [vmem:[#allocation6 + $0x2c] sm:$0xf] %v1789
    // Predicated region
    $region18: #{tpu_custom_call.1} parent=1 // pred_check
      _
    $region19: #{tpu_custom_call.1} parent=1 // pred_check_branch
      %1815 = sbr.rel (0) target = $region21
    $region20: #{tpu_custom_call.1} parent=1 // pred_region
      %s1817 = ssub.s32 768, 768
      %1818 = vsyncadd [#allocation5], %s1817
      %s1819 = sshll.u32 [#allocation6], 4
      %s1820 = int_to_ptr.vmem [resolvable:$true] %s1819
      %1825 = dma.vmem_to_hbm [thread:$0]  %s1820, 768, %s3, [#allocation5], 64, 64, 4
    $region21: #{tpu_custom_call.1} parent=1 // pred_fallthru
      _
    // Predicated region
    $region22: #{tpu_custom_call.1} parent=1 // pred_check
      _
    $region23: #{tpu_custom_call.1} parent=1 // pred_check_branch
      %1827 = sbr.rel (0) target = $region25
    $region24: #{tpu_custom_call.1} parent=1 // pred_region
      %1828 = dma.done [#allocation5], 768
    $region25: #{tpu_custom_call.1} parent=1 // pred_fallthru
      _
    %1829 = vsyncpa [#allocation4], 1
    %1830 = vsyncpa [#allocation5], 1

</llo_original>
